<compile_context>
chip_gen: v7x
topology: tpu7x:2x2x1
jax: 0.10.0
libtpu: 0.0.40
codegen_flags: <defaults>
</compile_context>

<pallas_src>
import functools

import jax
import jax.numpy as jnp
from jax.experimental import pallas as pl
from jax.experimental.pallas import tpu as pltpu

LN_EPS = 1e-5
MAX_ROW_TILE = 512            # rows per tile (edges or nodes)
VMEM_LIMIT = 32 * 1024 * 1024 # scoped VMEM budget; safe on v5e/v6e (128MiB) and v7x (64MiB)


# ----------------------------------------------------------------------------
# Shared in-kernel MLP body:  h = LN(W_L(...ReLU(W1a@a + W1b@b + b1)...))
# ----------------------------------------------------------------------------
def _mlp_body(a, b_in, p_refs, latent):
    """a: [rows, da], b_in: [rows, db] (any float dtype).

    p_refs = (w1a, w1b, b1, w2, b2, ..., wL, bL, gamma, beta); weights bf16,
    biases / LN params f32 [1, cols]; the last linear + LN are zero-padded to
    out_pad lanes.  Returns f32 [rows, out_pad] with lanes >= latent exactly 0.
    """
    gamma_ref, beta_ref = p_refs[-2], p_refs[-1]
    w1a_ref, w1b_ref, b1_ref = p_refs[0], p_refs[1], p_refs[2]
    rest = p_refs[3:-2]                       # (w2, b2, ..., wL, bL)

    # Layer 1: concat fused as two MXU matmuls (bf16 in, f32 accumulate).
    h = (jnp.dot(a.astype(jnp.bfloat16), w1a_ref[...],
                 preferred_element_type=jnp.float32)
         + jnp.dot(b_in.astype(jnp.bfloat16), w1b_ref[...],
                   preferred_element_type=jnp.float32)
         + b1_ref[...])

    n_rest = len(rest) // 2
    for i in range(n_rest):
        h = jnp.maximum(h, 0.0)               # ReLU (f32 on VPU)
        w = rest[2 * i][...]                  # bf16
        bb = rest[2 * i + 1][...]             # f32 [1, out]
        h = jnp.dot(h.astype(jnp.bfloat16), w,
                    preferred_element_type=jnp.float32) + bb

    # LayerNorm over the first `latent` lanes (remaining lanes are zero padding).
    lane = jax.lax.broadcasted_iota(jnp.int32, h.shape, 1)
    mask = (lane < latent).astype(jnp.float32)
    inv_d = 1.0 / latent
    mean = jnp.sum(h * mask, axis=-1, keepdims=True) * inv_d
    diff = (h - mean) * mask
    var = jnp.sum(diff * diff, axis=-1, keepdims=True) * inv_d
    h = diff * jax.lax.rsqrt(var + LN_EPS)
    return h * gamma_ref[...] + beta_ref[...]  # gamma/beta zero-padded -> pad lanes = 0


# ----------------------------------------------------------------------------
# Kernel 1: fused MLP1 + scatter_mean (grid over edge tiles, accumulating)
# ----------------------------------------------------------------------------
def _mlp1_scatter_kernel(col_ref, xr_ref, ea_ref, *refs, latent):
    out_ref = refs[-1]                        # [n_pad, out_pad] f32 accumulator
    p_refs = refs[:-1]
    k = pl.program_id(0)

    @pl.when(k == 0)
    def _init():
        out_ref[...] = jnp.zeros_like(out_ref)

    h = _mlp_body(xr_ref[...], ea_ref[...], p_refs, latent)   # [e_tile, out_pad]

    # Fuse the per-node count into the same matmul: 1.0 in spare lane `latent`.
    lane = jax.lax.broadcasted_iota(jnp.int32, h.shape, 1)
    h = h + (lane == latent).astype(jnp.float32)

    col = col_ref[...]                                        # [1, e_tile] int32
    n_pad = out_ref.shape[0]
    e_tile = h.shape[0]
    node_ids = jax.lax.broadcasted_iota(jnp.int32, (n_pad, e_tile), 0)
    onehot = (node_ids == col).astype(jnp.bfloat16)           # exact 0/1 in bf16

    out_ref[...] += jnp.dot(onehot, h.astype(jnp.bfloat16),
                            preferred_element_type=jnp.float32)

    @pl.when(k == pl.num_programs(0) - 1)
    def _finalize():
        acc = out_ref[...]
        lane_o = jax.lax.broadcasted_iota(jnp.int32, acc.shape, 1)
        counts = jnp.sum(acc * (lane_o == latent).astype(jnp.float32),
                         axis=-1, keepdims=True)
        counts = jnp.maximum(counts, 1.0)
        valid = (lane_o < latent).astype(jnp.float32)
        out_ref[...] = (acc / counts) * valid                 # mean; zero count/pad lanes


# ----------------------------------------------------------------------------
# Kernel 2: fused MLP2 (grid over node-row tiles, parallel)
# ----------------------------------------------------------------------------
def _mlp2_kernel(x_ref, agg_ref, *refs, latent):
    out_ref = refs[-1]
    h = _mlp_body(x_ref[...], agg_ref[...], refs[:-1], latent)
    out_ref[...] = h.astype(out_ref.dtype)


# ----------------------------------------------------------------------------
# Wrappers
# ----------------------------------------------------------------------------
def _round_up(n, m):
    return ((n + m - 1) // m) * m


def _row_tiles(n, max_tile=MAX_ROW_TILE):
    """Returns (tile, padded_total); tile divides padded_total, multiple of 8."""
    n8 = _round_up(max(n, 1), 8)
    if n8 <= max_tile:
        return n8, n8
    return max_tile, _round_up(n, max_tile)


def _pad_cols(a, to):
    pad = to - a.shape[-1]
    if pad <= 0:
        return a
    return jnp.pad(a, ((0, 0), (0, pad)))


def _pack_mlp(params, split_a, out_pad, pad_w1b_rows=None):
    """Flatten MLP params for the kernels.

    Returns [w1a, w1b, b1, w2, b2, ..., wL, bL, gamma, beta]:
      * layer-1 weight split at input row `split_a` (so concat is fused),
      * w1b optionally zero-row-padded (so the padded scatter output can be used
        directly without slicing),
      * last linear / LN zero-padded to `out_pad` lanes (lane-dense stores),
      * weights bf16, biases / LN params f32 [1, cols].
    """
    lin = params["linears"]
    assert len(lin) >= 2, "NodeModel MLPs always have >= 2 Linear layers"
    w1, b1 = lin[0]
    w1a = w1[:split_a]
    w1b = w1[split_a:]
    if pad_w1b_rows is not None and pad_w1b_rows > w1b.shape[0]:
        w1b = jnp.pad(w1b, ((0, pad_w1b_rows - w1b.shape[0]), (0, 0)))
    flat = [w1a.astype(jnp.bfloat16), w1b.astype(jnp.bfloat16),
            b1.reshape(1, -1).astype(jnp.float32)]
    n = len(lin)
    for i in range(1, n):
        w, b = lin[i]
        b = b.reshape(1, -1)
        if i == n - 1:
            w = _pad_cols(w, out_pad)
            b = _pad_cols(b, out_pad)
        flat.append(w.astype(jnp.bfloat16))
        flat.append(b.astype(jnp.float32))
    flat.append(_pad_cols(params["ln_gamma"].reshape(1, -1), out_pad).astype(jnp.float32))
    flat.append(_pad_cols(params["ln_beta"].reshape(1, -1), out_pad).astype(jnp.float32))
    return flat


def _full_specs(arrs):
    return [pl.BlockSpec(a.shape, lambda *_: (0, 0)) for a in arrs]


def mlp1_scatter(p1_flat, col, x_row, edge_attr, n_nodes, latent, out_pad):
    """Fused MLP1 + LayerNorm + scatter_mean.  Returns [n_pad, out_pad] f32."""
    E = x_row.shape[0]
    e_tile, e_pad = _row_tiles(E)
    n_pad = _round_up(n_nodes, 8)
    if e_pad != E:
        pad = e_pad - E
        x_row = jnp.pad(x_row, ((0, pad), (0, 0)))
        edge_attr = jnp.pad(edge_attr, ((0, pad), (0, 0)))
        col = jnp.pad(col, (0, pad), constant_values=-1)      # -1 never matches a node
    col2d = col.astype(jnp.int32).reshape(1, e_pad)
    x_row = x_row.astype(jnp.bfloat16)
    edge_attr = edge_attr.astype(jnp.bfloat16)

    grid = (e_pad // e_tile,)
    in_specs = ([pl.BlockSpec((1, e_tile), lambda k: (0, k)),
                 pl.BlockSpec((e_tile, x_row.shape[1]), lambda k: (k, 0)),
                 pl.BlockSpec((e_tile, edge_attr.shape[1]), lambda k: (k, 0))]
                + _full_specs(p1_flat))
    out_spec = pl.BlockSpec((n_pad, out_pad), lambda k: (0, 0))   # resident accumulator

    kernel = functools.partial(_mlp1_scatter_kernel, latent=latent)
    return pl.pallas_call(
        kernel,
        out_shape=jax.ShapeDtypeStruct((n_pad, out_pad), jnp.float32),
        grid=grid,
        in_specs=in_specs,
        out_specs=out_spec,
        compiler_params=pltpu.CompilerParams(
            dimension_semantics=("arbitrary",),        # accumulating edge axis
            vmem_limit_bytes=VMEM_LIMIT),
    )(col2d, x_row, edge_attr, *p1_flat)


def mlp2_forward(p2_flat, x, agg, latent, out_pad):
    """Fused MLP2 + LayerNorm over [x | agg].  Returns [N, latent] f32."""
    N = x.shape[0]
    n_tile, n_pad = _row_tiles(N)
    if n_pad != N:
        x = jnp.pad(x, ((0, n_pad - N), (0, 0)))
    if n_pad != agg.shape[0]:
        agg = jnp.pad(agg, ((0, n_pad - agg.shape[0]), (0, 0)))
    x = x.astype(jnp.bfloat16)

    grid = (n_pad // n_tile,)
    in_specs = ([pl.BlockSpec((n_tile, x.shape[1]), lambda i: (i, 0)),
                 pl.BlockSpec((n_tile, agg.shape[1]), lambda i: (i, 0))]
                + _full_specs(p2_flat))
    out_spec = pl.BlockSpec((n_tile, out_pad), lambda i: (i, 0))

    kernel = functools.partial(_mlp2_kernel, latent=latent)
    out = pl.pallas_call(
        kernel,
        out_shape=jax.ShapeDtypeStruct((n_pad, out_pad), jnp.float32),
        grid=grid,
        in_specs=in_specs,
        out_specs=out_spec,
        compiler_params=pltpu.CompilerParams(
            dimension_semantics=("parallel",),         # independent row tiles
            vmem_limit_bytes=VMEM_LIMIT),
    )(x, agg, *p2_flat)
    return out[:N, :latent]


def node_model_forward(params, x, edge_index, edge_attr, u=None, batch=None):
    # u, batch accepted for API parity but unused (as in the PyTorch module).
    row = edge_index[0]
    col = edge_index[1]
    node_dim = x.shape[1]
    latent = params["node_mlp_1"]["linears"][-1][0].shape[1]
    out_pad = _round_up(latent + 1, 128)       # lane-dense output + 1 spare count lane

    p1 = _pack_mlp(params["node_mlp_1"], split_a=node_dim, out_pad=out_pad)
    p2 = _pack_mlp(params["node_mlp_2"], split_a=node_dim, out_pad=out_pad,
                   pad_w1b_rows=out_pad)

    x_row = jnp.take(x, row, axis=0)           # TODO(synk): fuse gather via scalar prefetch
    agg = mlp1_scatter(p1, col, x_row, edge_attr, x.shape[0], latent, out_pad)
    return mlp2_forward(p2, x, agg, latent, out_pad)


# ----------------------------------------------------------------------------
# Deterministic parameter init (kaiming normal fan_in for Linear, LN w=1 b=0)
# ----------------------------------------------------------------------------
def init_mlp(key, input_size, hidden_size, n_hidden_layers, output_size):
    dims = [input_size] + [hidden_size] * n_hidden_layers + [output_size]
    linears = []
    for i in range(len(dims) - 1):
        key, k = jax.random.split(key)
        std = (2.0 / dims[i]) ** 0.5
        w = jax.random.normal(k, (dims[i], dims[i + 1]), jnp.float32) * std
        b = jnp.zeros((dims[i + 1],), jnp.float32)
        linears.append((w, b))
    return {
        "linears": linears,
        "ln_gamma": jnp.ones((output_size,), jnp.float32),
        "ln_beta": jnp.zeros((output_size,), jnp.float32),
    }


def init_node_model(key, node_latent, edge_latent, hidden, n_hidden, latent):
    k1, k2 = jax.random.split(key)
    return {
        "node_mlp_1": init_mlp(k1, node_latent + edge_latent, hidden, n_hidden, latent),
        "node_mlp_2": init_mlp(k2, node_latent + latent, hidden, n_hidden, latent),
    }


# ----------------------------------------------------------------------------
# Pure f32 JAX reference (for correctness check)
# ----------------------------------------------------------------------------
def _mlp_ref(x, params):
    h = x
    n_lin = len(params["linears"])
    for i, (w, b) in enumerate(params["linears"]):
        h = h @ w + b
        if i < n_lin - 1:
            h = jnp.maximum(h, 0.0)
    mean = jnp.mean(h, axis=-1, keepdims=True)
    var = jnp.mean((h - mean) ** 2, axis=-1, keepdims=True)
    h = (h - mean) / jnp.sqrt(var + LN_EPS)
    return h * params["ln_gamma"] + params["ln_beta"]


def _node_model_ref(params, x, edge_index, edge_attr):
    row, col = edge_index[0], edge_index[1]
    out = jnp.concatenate([x[row], edge_attr], axis=1)
    out = _mlp_ref(out, params["node_mlp_1"])
    N = x.shape[0]
    sums = jax.ops.segment_sum(out, col, num_segments=N)
    cnts = jax.ops.segment_sum(jnp.ones((out.shape[0],), jnp.float32), col,
                               num_segments=N)
    mean = sums / jnp.maximum(cnts, 1.0)[:, None]
    out = jnp.concatenate([x, mean], axis=1)
    return _mlp_ref(out, params["node_mlp_2"])


# ----------------------------------------------------------------------------
if __name__ == "__main__":
    # Small synthetic graph: 8 nodes, 16 edges.
    node_latent_size = 16
    edge_latent_size = 16
    mlp_hidden_size = 32
    mlp_n_hidden_layers = 2
    latent_size = 16
    N, E = 8, 16

    key = jax.random.PRNGKey(0)
    kp, kx, ke, kei = jax.random.split(key, 4)

    params = init_node_model(kp, node_latent_size, edge_latent_size,
                             mlp_hidden_size, mlp_n_hidden_layers, latent_size)

    x = jax.random.normal(kx, (N, node_latent_size), jnp.float32)
    edge_attr = jax.random.normal(ke, (E, edge_latent_size), jnp.float32)
    edge_index = jax.random.randint(kei, (2, E), 0, N, dtype=jnp.int32)
    u = jnp.zeros((1, 4), jnp.float32)           # unused (parity with PyTorch API)
    batch = jnp.zeros((N,), jnp.int32)           # unused

    fwd = jax.jit(node_model_forward)
    out = jax.block_until_ready(fwd(params, x, edge_index, edge_attr, u, batch))

    ref = _node_model_ref(params, x, edge_index, edge_attr)
    assert out.shape == (N, latent_size)
    # bf16 MXU inputs with f32 accumulation => looser tolerance than pure-f32.
    assert jnp.allclose(out, ref, atol=5e-2, rtol=5e-2), "mismatch vs JAX reference"

    print("KERNEL_OK")
</pallas_src>

<mosaic_0001>
module attributes {stable_mosaic.version = 11 : i64} {
  func.func @_mlp2_kernel(%arg0: i32, %arg1: memref<8x16xbf16, #tpu.memory_space<vmem>>, %arg2: memref<8x128xf32, #tpu.memory_space<vmem>>, %arg3: memref<16x32xbf16, #tpu.memory_space<vmem>>, %arg4: memref<128x32xbf16, #tpu.memory_space<vmem>>, %arg5: memref<1x32xf32, #tpu.memory_space<vmem>>, %arg6: memref<32x32xbf16, #tpu.memory_space<vmem>>, %arg7: memref<1x32xf32, #tpu.memory_space<vmem>>, %arg8: memref<32x128xbf16, #tpu.memory_space<vmem>>, %arg9: memref<1x128xf32, #tpu.memory_space<vmem>>, %arg10: memref<1x128xf32, #tpu.memory_space<vmem>>, %arg11: memref<1x128xf32, #tpu.memory_space<vmem>>, %arg12: memref<8x128xf32, #tpu.memory_space<vmem>>) attributes {dimension_semantics = [#tpu.dimension_semantics<parallel>], iteration_bounds = array<i64: 1>, scalar_prefetch = 0 : i64, scratch_operands = 0 : i64, tpu.core_type = #tpu.core_type<tc>, window_params = [{transform_indices = @transform_0, window_bounds = array<i64: 8, 16>}, {transform_indices = @transform_1, window_bounds = array<i64: 8, 128>}, {pipeline_mode = #tpu.pipeline_mode<synchronous>, transform_indices = @transform_2, window_bounds = array<i64: 16, 32>}, {pipeline_mode = #tpu.pipeline_mode<synchronous>, transform_indices = @transform_3, window_bounds = array<i64: 128, 32>}, {pipeline_mode = #tpu.pipeline_mode<synchronous>, transform_indices = @transform_4, window_bounds = array<i64: 1, 32>}, {pipeline_mode = #tpu.pipeline_mode<synchronous>, transform_indices = @transform_5, window_bounds = array<i64: 32, 32>}, {pipeline_mode = #tpu.pipeline_mode<synchronous>, transform_indices = @transform_6, window_bounds = array<i64: 1, 32>}, {pipeline_mode = #tpu.pipeline_mode<synchronous>, transform_indices = @transform_7, window_bounds = array<i64: 32, 128>}, {pipeline_mode = #tpu.pipeline_mode<synchronous>, transform_indices = @transform_8, window_bounds = array<i64: 1, 128>}, {pipeline_mode = #tpu.pipeline_mode<synchronous>, transform_indices = @transform_9, window_bounds = array<i64: 1, 128>}, {pipeline_mode = #tpu.pipeline_mode<synchronous>, transform_indices = @transform_10, window_bounds = array<i64: 1, 128>}, {transform_indices = @transform_11, window_bounds = array<i64: 8, 128>}]} {
    %c0 = arith.constant 0 : index
    %c0_0 = arith.constant 0 : index
    %0 = vector.load %arg1[%c0, %c0_0] : memref<8x16xbf16, #tpu.memory_space<vmem>>, vector<8x16xbf16>
    %c0_1 = arith.constant 0 : index
    %c0_2 = arith.constant 0 : index
    %1 = vector.load %arg2[%c0_1, %c0_2] : memref<8x128xf32, #tpu.memory_space<vmem>>, vector<8x128xf32>
    %c0_3 = arith.constant 0 : index
    %c0_4 = arith.constant 0 : index
    %2 = vector.load %arg3[%c0_3, %c0_4] : memref<16x32xbf16, #tpu.memory_space<vmem>>, vector<16x32xbf16>
    %cst = arith.constant dense<0.000000e+00> : vector<8x32xf32>
    %3 = tpu.matmul %0, %2, %cst {dimension_numbers = #tpu.dot_dimension_numbers<[1], [0], [0], [1], [0, 0, 1, 1], [], []>} : vector<8x16xbf16>, vector<16x32xbf16>, vector<8x32xf32> -> vector<8x32xf32>
    %4 = arith.truncf %1 : vector<8x128xf32> to vector<8x128xbf16>
    %c0_5 = arith.constant 0 : index
    %c0_6 = arith.constant 0 : index
    %5 = vector.load %arg4[%c0_5, %c0_6] : memref<128x32xbf16, #tpu.memory_space<vmem>>, vector<128x32xbf16>
    %cst_7 = arith.constant dense<0.000000e+00> : vector<8x32xf32>
    %6 = tpu.matmul %4, %5, %cst_7 {dimension_numbers = #tpu.dot_dimension_numbers<[1], [0], [0], [1], [0, 0, 1, 1], [], []>} : vector<8x128xbf16>, vector<128x32xbf16>, vector<8x32xf32> -> vector<8x32xf32>
    %7 = arith.addf %3, %6 : vector<8x32xf32>
    %c0_8 = arith.constant 0 : index
    %c0_9 = arith.constant 0 : index
    %8 = vector.load %arg5[%c0_8, %c0_9] : memref<1x32xf32, #tpu.memory_space<vmem>>, vector<1x32xf32>
    %9 = vector.broadcast %8 : vector<1x32xf32> to vector<8x32xf32>
    %10 = arith.addf %7, %9 : vector<8x32xf32>
    %cst_10 = arith.constant 0.000000e+00 : f32
    %11 = vector.broadcast %cst_10 : f32 to vector<8x32xf32>
    %12 = arith.maximumf %10, %11 : vector<8x32xf32>
    %c0_11 = arith.constant 0 : index
    %c0_12 = arith.constant 0 : index
    %13 = vector.load %arg6[%c0_11, %c0_12] : memref<32x32xbf16, #tpu.memory_space<vmem>>, vector<32x32xbf16>
    %c0_13 = arith.constant 0 : index
    %c0_14 = arith.constant 0 : index
    %14 = vector.load %arg7[%c0_13, %c0_14] : memref<1x32xf32, #tpu.memory_space<vmem>>, vector<1x32xf32>
    %15 = arith.truncf %12 : vector<8x32xf32> to vector<8x32xbf16>
    %cst_15 = arith.constant dense<0.000000e+00> : vector<8x32xf32>
    %16 = tpu.matmul %15, %13, %cst_15 {dimension_numbers = #tpu.dot_dimension_numbers<[1], [0], [0], [1], [0, 0, 1, 1], [], []>} : vector<8x32xbf16>, vector<32x32xbf16>, vector<8x32xf32> -> vector<8x32xf32>
    %17 = vector.broadcast %14 : vector<1x32xf32> to vector<8x32xf32>
    %18 = arith.addf %16, %17 : vector<8x32xf32>
    %cst_16 = arith.constant 0.000000e+00 : f32
    %19 = vector.broadcast %cst_16 : f32 to vector<8x32xf32>
    %20 = arith.maximumf %18, %19 : vector<8x32xf32>
    %c0_17 = arith.constant 0 : index
    %c0_18 = arith.constant 0 : index
    %21 = vector.load %arg8[%c0_17, %c0_18] : memref<32x128xbf16, #tpu.memory_space<vmem>>, vector<32x128xbf16>
    %c0_19 = arith.constant 0 : index
    %c0_20 = arith.constant 0 : index
    %22 = vector.load %arg9[%c0_19, %c0_20] : memref<1x128xf32, #tpu.memory_space<vmem>>, vector<1x128xf32>
    %23 = arith.truncf %20 : vector<8x32xf32> to vector<8x32xbf16>
    %cst_21 = arith.constant dense<0.000000e+00> : vector<8x128xf32>
    %24 = tpu.matmul %23, %21, %cst_21 {dimension_numbers = #tpu.dot_dimension_numbers<[1], [0], [0], [1], [0, 0, 1, 1], [], []>} : vector<8x32xbf16>, vector<32x128xbf16>, vector<8x128xf32> -> vector<8x128xf32>
    %25 = vector.broadcast %22 : vector<1x128xf32> to vector<8x128xf32>
    %26 = arith.addf %24, %25 : vector<8x128xf32>
    %27 = tpu.iota {dimensions = array<i32: 1>} : vector<8x128xi32>
    %c16_i32 = arith.constant 16 : i32
    %28 = vector.broadcast %c16_i32 : i32 to vector<8x128xi32>
    %29 = arith.cmpi slt, %27, %28 : vector<8x128xi32>
    %30 = arith.extui %29 : vector<8x128xi1> to vector<8x128xi32>
    %31 = arith.sitofp %30 : vector<8x128xi32> to vector<8x128xf32>
    %32 = arith.mulf %26, %31 : vector<8x128xf32>
    %cst_22 = arith.constant dense<0.000000e+00> : vector<8xf32>
    %33 = vector.multi_reduction <add>, %32, %cst_22 [1] : vector<8x128xf32> to vector<8xf32>
    %34 = vector.shape_cast %33 : vector<8xf32> to vector<8x1xf32>
    %cst_23 = arith.constant 6.250000e-02 : f32
    %35 = vector.broadcast %cst_23 : f32 to vector<8x1xf32>
    %36 = arith.mulf %34, %35 : vector<8x1xf32>
    %37 = vector.broadcast %36 : vector<8x1xf32> to vector<8x128xf32>
    %38 = arith.subf %26, %37 : vector<8x128xf32>
    %39 = arith.mulf %38, %31 : vector<8x128xf32>
    %40 = arith.mulf %39, %39 : vector<8x128xf32>
    %cst_24 = arith.constant dense<0.000000e+00> : vector<8xf32>
    %41 = vector.multi_reduction <add>, %40, %cst_24 [1] : vector<8x128xf32> to vector<8xf32>
    %42 = vector.shape_cast %41 : vector<8xf32> to vector<8x1xf32>
    %cst_25 = arith.constant 6.250000e-02 : f32
    %43 = vector.broadcast %cst_25 : f32 to vector<8x1xf32>
    %44 = arith.mulf %42, %43 : vector<8x1xf32>
    %cst_26 = arith.constant 9.99999974E-6 : f32
    %45 = vector.broadcast %cst_26 : f32 to vector<8x1xf32>
    %46 = arith.addf %44, %45 : vector<8x1xf32>
    %47 = math.rsqrt %46 : vector<8x1xf32>
    %48 = vector.broadcast %47 : vector<8x1xf32> to vector<8x128xf32>
    %49 = arith.mulf %39, %48 : vector<8x128xf32>
    %c0_27 = arith.constant 0 : index
    %c0_28 = arith.constant 0 : index
    %50 = vector.load %arg10[%c0_27, %c0_28] : memref<1x128xf32, #tpu.memory_space<vmem>>, vector<1x128xf32>
    %51 = vector.broadcast %50 : vector<1x128xf32> to vector<8x128xf32>
    %52 = arith.mulf %49, %51 : vector<8x128xf32>
    %c0_29 = arith.constant 0 : index
    %c0_30 = arith.constant 0 : index
    %53 = vector.load %arg11[%c0_29, %c0_30] : memref<1x128xf32, #tpu.memory_space<vmem>>, vector<1x128xf32>
    %54 = vector.broadcast %53 : vector<1x128xf32> to vector<8x128xf32>
    %55 = arith.addf %52, %54 : vector<8x128xf32>
    %c0_31 = arith.constant 0 : index
    %c0_32 = arith.constant 0 : index
    %56 = vector.load %arg12[%c0_31, %c0_32] : memref<8x128xf32, #tpu.memory_space<vmem>>, vector<8x128xf32>
    tpu.vector_store %arg12[%c0_31, %c0_32], %55 {strides = array<i32>} : memref<8x128xf32, #tpu.memory_space<vmem>>, vector<8x128xf32>,
    return
  }
  func.func @transform_0(%arg0: i32) -> (i32, i32) {
    %c0_i32 = arith.constant 0 : i32
    %c0_i32_0 = arith.constant 0 : i32
    return %arg0, %c0_i32 : i32, i32
  }
  func.func @transform_1(%arg0: i32) -> (i32, i32) {
    %c0_i32 = arith.constant 0 : i32
    %c0_i32_0 = arith.constant 0 : i32
    return %arg0, %c0_i32 : i32, i32
  }
  func.func @transform_2(%arg0: i32) -> (i32, i32) {
    %c0_i32 = arith.constant 0 : i32
    %c0_i32_0 = arith.constant 0 : i32
    %c0_i32_1 = arith.constant 0 : i32
    return %c0_i32, %c0_i32_0 : i32, i32
  }
  func.func @transform_3(%arg0: i32) -> (i32, i32) {
    %c0_i32 = arith.constant 0 : i32
    %c0_i32_0 = arith.constant 0 : i32
    %c0_i32_1 = arith.constant 0 : i32
    return %c0_i32, %c0_i32_0 : i32, i32
  }
  func.func @transform_4(%arg0: i32) -> (i32, i32) {
    %c0_i32 = arith.constant 0 : i32
    %c0_i32_0 = arith.constant 0 : i32
    %c0_i32_1 = arith.constant 0 : i32
    return %c0_i32, %c0_i32_0 : i32, i32
  }
  func.func @transform_5(%arg0: i32) -> (i32, i32) {
    %c0_i32 = arith.constant 0 : i32
    %c0_i32_0 = arith.constant 0 : i32
    %c0_i32_1 = arith.constant 0 : i32
    return %c0_i32, %c0_i32_0 : i32, i32
  }
  func.func @transform_6(%arg0: i32) -> (i32, i32) {
    %c0_i32 = arith.constant 0 : i32
    %c0_i32_0 = arith.constant 0 : i32
    %c0_i32_1 = arith.constant 0 : i32
    return %c0_i32, %c0_i32_0 : i32, i32
  }
  func.func @transform_7(%arg0: i32) -> (i32, i32) {
    %c0_i32 = arith.constant 0 : i32
    %c0_i32_0 = arith.constant 0 : i32
    %c0_i32_1 = arith.constant 0 : i32
    return %c0_i32, %c0_i32_0 : i32, i32
  }
  func.func @transform_8(%arg0: i32) -> (i32, i32) {
    %c0_i32 = arith.constant 0 : i32
    %c0_i32_0 = arith.constant 0 : i32
    %c0_i32_1 = arith.constant 0 : i32
    return %c0_i32, %c0_i32_0 : i32, i32
  }
  func.func @transform_9(%arg0: i32) -> (i32, i32) {
    %c0_i32 = arith.constant 0 : i32
    %c0_i32_0 = arith.constant 0 : i32
    %c0_i32_1 = arith.constant 0 : i32
    return %c0_i32, %c0_i32_0 : i32, i32
  }
  func.func @transform_10(%arg0: i32) -> (i32, i32) {
    %c0_i32 = arith.constant 0 : i32
    %c0_i32_0 = arith.constant 0 : i32
    %c0_i32_1 = arith.constant 0 : i32
    return %c0_i32, %c0_i32_0 : i32, i32
  }
  func.func @transform_11(%arg0: i32) -> (i32, i32) {
    %c0_i32 = arith.constant 0 : i32
    %c0_i32_0 = arith.constant 0 : i32
    return %arg0, %c0_i32 : i32, i32
  }
}

module attributes {stable_mosaic.version = 11 : i64} {
  func.func @_mlp1_scatter_kernel(%arg0: i32, %arg1: memref<1x16xi32, #tpu.memory_space<vmem>>, %arg2: memref<16x16xbf16, #tpu.memory_space<vmem>>, %arg3: memref<16x16xbf16, #tpu.memory_space<vmem>>, %arg4: memref<16x32xbf16, #tpu.memory_space<vmem>>, %arg5: memref<16x32xbf16, #tpu.memory_space<vmem>>, %arg6: memref<1x32xf32, #tpu.memory_space<vmem>>, %arg7: memref<32x32xbf16, #tpu.memory_space<vmem>>, %arg8: memref<1x32xf32, #tpu.memory_space<vmem>>, %arg9: memref<32x128xbf16, #tpu.memory_space<vmem>>, %arg10: memref<1x128xf32, #tpu.memory_space<vmem>>, %arg11: memref<1x128xf32, #tpu.memory_space<vmem>>, %arg12: memref<1x128xf32, #tpu.memory_space<vmem>>, %arg13: memref<8x128xf32, #tpu.memory_space<vmem>>) attributes {dimension_semantics = [#tpu.dimension_semantics<arbitrary>], iteration_bounds = array<i64: 1>, scalar_prefetch = 0 : i64, scratch_operands = 0 : i64, tpu.core_type = #tpu.core_type<tc>, window_params = [{transform_indices = @transform_0, window_bounds = array<i64: 1, 16>}, {transform_indices = @transform_1, window_bounds = array<i64: 16, 16>}, {transform_indices = @transform_2, window_bounds = array<i64: 16, 16>}, {pipeline_mode = #tpu.pipeline_mode<synchronous>, transform_indices = @transform_3, window_bounds = array<i64: 16, 32>}, {pipeline_mode = #tpu.pipeline_mode<synchronous>, transform_indices = @transform_4, window_bounds = array<i64: 16, 32>}, {pipeline_mode = #tpu.pipeline_mode<synchronous>, transform_indices = @transform_5, window_bounds = array<i64: 1, 32>}, {pipeline_mode = #tpu.pipeline_mode<synchronous>, transform_indices = @transform_6, window_bounds = array<i64: 32, 32>}, {pipeline_mode = #tpu.pipeline_mode<synchronous>, transform_indices = @transform_7, window_bounds = array<i64: 1, 32>}, {pipeline_mode = #tpu.pipeline_mode<synchronous>, transform_indices = @transform_8, window_bounds = array<i64: 32, 128>}, {pipeline_mode = #tpu.pipeline_mode<synchronous>, transform_indices = @transform_9, window_bounds = array<i64: 1, 128>}, {pipeline_mode = #tpu.pipeline_mode<synchronous>, transform_indices = @transform_10, window_bounds = array<i64: 1, 128>}, {pipeline_mode = #tpu.pipeline_mode<synchronous>, transform_indices = @transform_11, window_bounds = array<i64: 1, 128>}, {pipeline_mode = #tpu.pipeline_mode<synchronous>, transform_indices = @transform_12, window_bounds = array<i64: 8, 128>}]} {
    %c0_i32 = arith.constant 0 : i32
    %0 = arith.cmpi eq, %arg0, %c0_i32 : i32
    %1 = arith.extui %0 : i1 to i32
    %c0_i32_0 = arith.constant 0 : i32
    %2 = arith.cmpi ne, %1, %c0_i32_0 : i32
    scf.if %2 {
      %cst_42 = arith.constant 0.000000e+00 : f32
      %79 = vector.broadcast %cst_42 : f32 to vector<8x128xf32>
      %c0_43 = arith.constant 0 : index
      %c0_44 = arith.constant 0 : index
      %80 = vector.load %arg13[%c0_43, %c0_44] : memref<8x128xf32, #tpu.memory_space<vmem>>, vector<8x128xf32>
      tpu.vector_store %arg13[%c0_43, %c0_44], %79 {strides = array<i32>} : memref<8x128xf32, #tpu.memory_space<vmem>>, vector<8x128xf32>,
    } else {
    }
    %c0 = arith.constant 0 : index
    %c0_1 = arith.constant 0 : index
    %3 = vector.load %arg2[%c0, %c0_1] : memref<16x16xbf16, #tpu.memory_space<vmem>>, vector<16x16xbf16>
    %c0_2 = arith.constant 0 : index
    %c0_3 = arith.constant 0 : index
    %4 = vector.load %arg3[%c0_2, %c0_3] : memref<16x16xbf16, #tpu.memory_space<vmem>>, vector<16x16xbf16>
    %c0_4 = arith.constant 0 : index
    %c0_5 = arith.constant 0 : index
    %5 = vector.load %arg4[%c0_4, %c0_5] : memref<16x32xbf16, #tpu.memory_space<vmem>>, vector<16x32xbf16>
    %cst = arith.constant dense<0.000000e+00> : vector<16x32xf32>
    %6 = tpu.matmul %3, %5, %cst {dimension_numbers = #tpu.dot_dimension_numbers<[1], [0], [0], [1], [0, 0, 1, 1], [], []>} : vector<16x16xbf16>, vector<16x32xbf16>, vector<16x32xf32> -> vector<16x32xf32>
    %c0_6 = arith.constant 0 : index
    %c0_7 = arith.constant 0 : index
    %7 = vector.load %arg5[%c0_6, %c0_7] : memref<16x32xbf16, #tpu.memory_space<vmem>>, vector<16x32xbf16>
    %cst_8 = arith.constant dense<0.000000e+00> : vector<16x32xf32>
    %8 = tpu.matmul %4, %7, %cst_8 {dimension_numbers = #tpu.dot_dimension_numbers<[1], [0], [0], [1], [0, 0, 1, 1], [], []>} : vector<16x16xbf16>, vector<16x32xbf16>, vector<16x32xf32> -> vector<16x32xf32>
    %9 = arith.addf %6, %8 : vector<16x32xf32>
    %c0_9 = arith.constant 0 : index
    %c0_10 = arith.constant 0 : index
    %10 = vector.load %arg6[%c0_9, %c0_10] : memref<1x32xf32, #tpu.memory_space<vmem>>, vector<1x32xf32>
    %11 = vector.broadcast %10 : vector<1x32xf32> to vector<16x32xf32>
    %12 = arith.addf %9, %11 : vector<16x32xf32>
    %cst_11 = arith.constant 0.000000e+00 : f32
    %13 = vector.broadcast %cst_11 : f32 to vector<16x32xf32>
    %14 = arith.maximumf %12, %13 : vector<16x32xf32>
    %c0_12 = arith.constant 0 : index
    %c0_13 = arith.constant 0 : index
    %15 = vector.load %arg7[%c0_12, %c0_13] : memref<32x32xbf16, #tpu.memory_space<vmem>>, vector<32x32xbf16>
    %c0_14 = arith.constant 0 : index
    %c0_15 = arith.constant 0 : index
    %16 = vector.load %arg8[%c0_14, %c0_15] : memref<1x32xf32, #tpu.memory_space<vmem>>, vector<1x32xf32>
    %17 = arith.truncf %14 : vector<16x32xf32> to vector<16x32xbf16>
    %cst_16 = arith.constant dense<0.000000e+00> : vector<16x32xf32>
    %18 = tpu.matmul %17, %15, %cst_16 {dimension_numbers = #tpu.dot_dimension_numbers<[1], [0], [0], [1], [0, 0, 1, 1], [], []>} : vector<16x32xbf16>, vector<32x32xbf16>, vector<16x32xf32> -> vector<16x32xf32>
    %19 = vector.broadcast %16 : vector<1x32xf32> to vector<16x32xf32>
    %20 = arith.addf %18, %19 : vector<16x32xf32>
    %cst_17 = arith.constant 0.000000e+00 : f32
    %21 = vector.broadcast %cst_17 : f32 to vector<16x32xf32>
    %22 = arith.maximumf %20, %21 : vector<16x32xf32>
    %c0_18 = arith.constant 0 : index
    %c0_19 = arith.constant 0 : index
    %23 = vector.load %arg9[%c0_18, %c0_19] : memref<32x128xbf16, #tpu.memory_space<vmem>>, vector<32x128xbf16>
    %c0_20 = arith.constant 0 : index
    %c0_21 = arith.constant 0 : index
    %24 = vector.load %arg10[%c0_20, %c0_21] : memref<1x128xf32, #tpu.memory_space<vmem>>, vector<1x128xf32>
    %25 = arith.truncf %22 : vector<16x32xf32> to vector<16x32xbf16>
    %cst_22 = arith.constant dense<0.000000e+00> : vector<16x128xf32>
    %26 = tpu.matmul %25, %23, %cst_22 {dimension_numbers = #tpu.dot_dimension_numbers<[1], [0], [0], [1], [0, 0, 1, 1], [], []>} : vector<16x32xbf16>, vector<32x128xbf16>, vector<16x128xf32> -> vector<16x128xf32>
    %27 = vector.broadcast %24 : vector<1x128xf32> to vector<16x128xf32>
    %28 = arith.addf %26, %27 : vector<16x128xf32>
    %29 = tpu.iota {dimensions = array<i32: 1>} : vector<16x128xi32>
    %c16_i32 = arith.constant 16 : i32
    %30 = vector.broadcast %c16_i32 : i32 to vector<16x128xi32>
    %31 = arith.cmpi slt, %29, %30 : vector<16x128xi32>
    %32 = arith.extui %31 : vector<16x128xi1> to vector<16x128xi32>
    %33 = arith.sitofp %32 : vector<16x128xi32> to vector<16x128xf32>
    %34 = arith.mulf %28, %33 : vector<16x128xf32>
    %cst_23 = arith.constant dense<0.000000e+00> : vector<16xf32>
    %35 = vector.multi_reduction <add>, %34, %cst_23 [1] : vector<16x128xf32> to vector<16xf32>
    %36 = vector.shape_cast %35 : vector<16xf32> to vector<16x1xf32>
    %cst_24 = arith.constant 6.250000e-02 : f32
    %37 = vector.broadcast %cst_24 : f32 to vector<16x1xf32>
    %38 = arith.mulf %36, %37 : vector<16x1xf32>
    %39 = vector.broadcast %38 : vector<16x1xf32> to vector<16x128xf32>
    %40 = arith.subf %28, %39 : vector<16x128xf32>
    %41 = arith.mulf %40, %33 : vector<16x128xf32>
    %42 = arith.mulf %41, %41 : vector<16x128xf32>
    %cst_25 = arith.constant dense<0.000000e+00> : vector<16xf32>
    %43 = vector.multi_reduction <add>, %42, %cst_25 [1] : vector<16x128xf32> to vector<16xf32>
    %44 = vector.shape_cast %43 : vector<16xf32> to vector<16x1xf32>
    %cst_26 = arith.constant 6.250000e-02 : f32
    %45 = vector.broadcast %cst_26 : f32 to vector<16x1xf32>
    %46 = arith.mulf %44, %45 : vector<16x1xf32>
    %cst_27 = arith.constant 9.99999974E-6 : f32
    %47 = vector.broadcast %cst_27 : f32 to vector<16x1xf32>
    %48 = arith.addf %46, %47 : vector<16x1xf32>
    %49 = math.rsqrt %48 : vector<16x1xf32>
    %50 = vector.broadcast %49 : vector<16x1xf32> to vector<16x128xf32>
    %51 = arith.mulf %41, %50 : vector<16x128xf32>
    %c0_28 = arith.constant 0 : index
    %c0_29 = arith.constant 0 : index
    %52 = vector.load %arg11[%c0_28, %c0_29] : memref<1x128xf32, #tpu.memory_space<vmem>>, vector<1x128xf32>
    %53 = vector.broadcast %52 : vector<1x128xf32> to vector<16x128xf32>
    %54 = arith.mulf %51, %53 : vector<16x128xf32>
    %c0_30 = arith.constant 0 : index
    %c0_31 = arith.constant 0 : index
    %55 = vector.load %arg12[%c0_30, %c0_31] : memref<1x128xf32, #tpu.memory_space<vmem>>, vector<1x128xf32>
    %56 = vector.broadcast %55 : vector<1x128xf32> to vector<16x128xf32>
    %57 = arith.addf %54, %56 : vector<16x128xf32>
    %58 = tpu.iota {dimensions = array<i32: 1>} : vector<16x128xi32>
    %c16_i32_32 = arith.constant 16 : i32
    %59 = vector.broadcast %c16_i32_32 : i32 to vector<16x128xi32>
    %60 = arith.cmpi eq, %58, %59 : vector<16x128xi32>
    %61 = arith.extui %60 : vector<16x128xi1> to vector<16x128xi32>
    %62 = arith.sitofp %61 : vector<16x128xi32> to vector<16x128xf32>
    %63 = arith.addf %57, %62 : vector<16x128xf32>
    %c0_33 = arith.constant 0 : index
    %c0_34 = arith.constant 0 : index
    %64 = vector.load %arg1[%c0_33, %c0_34] : memref<1x16xi32, #tpu.memory_space<vmem>>, vector<1x16xi32>
    %65 = tpu.iota {dimensions = array<i32: 0>} : vector<8x16xi32>
    %66 = vector.broadcast %64 : vector<1x16xi32> to vector<8x16xi32>
    %67 = arith.cmpi eq, %65, %66 : vector<8x16xi32>
    %68 = arith.extui %67 : vector<8x16xi1> to vector<8x16xi32>
    %69 = arith.sitofp %68 : vector<8x16xi32> to vector<8x16xf32>
    %70 = arith.truncf %69 : vector<8x16xf32> to vector<8x16xbf16>
    %c0_35 = arith.constant 0 : index
    %c0_36 = arith.constant 0 : index
    %71 = vector.load %arg13[%c0_35, %c0_36] : memref<8x128xf32, #tpu.memory_space<vmem>>, vector<8x128xf32>
    %72 = arith.truncf %63 : vector<16x128xf32> to vector<16x128xbf16>
    %cst_37 = arith.constant dense<0.000000e+00> : vector<8x128xf32>
    %73 = tpu.matmul %70, %72, %cst_37 {dimension_numbers = #tpu.dot_dimension_numbers<[1], [0], [0], [1], [0, 0, 1, 1], [], []>} : vector<8x16xbf16>, vector<16x128xbf16>, vector<8x128xf32> -> vector<8x128xf32>
    %74 = arith.addf %71, %73 : vector<8x128xf32>
    %c0_38 = arith.constant 0 : index
    %c0_39 = arith.constant 0 : index
    %75 = vector.load %arg13[%c0_38, %c0_39] : memref<8x128xf32, #tpu.memory_space<vmem>>, vector<8x128xf32>
    tpu.vector_store %arg13[%c0_38, %c0_39], %74 {strides = array<i32>} : memref<8x128xf32, #tpu.memory_space<vmem>>, vector<8x128xf32>,
    %c0_i32_40 = arith.constant 0 : i32
    %76 = arith.cmpi eq, %arg0, %c0_i32_40 : i32
    %77 = arith.extui %76 : i1 to i32
    %c0_i32_41 = arith.constant 0 : i32
    %78 = arith.cmpi ne, %77, %c0_i32_41 : i32
    scf.if %78 {
      %c0_42 = arith.constant 0 : index
      %c0_43 = arith.constant 0 : index
      %79 = vector.load %arg13[%c0_42, %c0_43] : memref<8x128xf32, #tpu.memory_space<vmem>>, vector<8x128xf32>
      %80 = tpu.iota {dimensions = array<i32: 1>} : vector<8x128xi32>
      %c16_i32_44 = arith.constant 16 : i32
      %81 = vector.broadcast %c16_i32_44 : i32 to vector<8x128xi32>
      %82 = arith.cmpi eq, %80, %81 : vector<8x128xi32>
      %83 = arith.extui %82 : vector<8x128xi1> to vector<8x128xi32>
      %84 = arith.sitofp %83 : vector<8x128xi32> to vector<8x128xf32>
      %85 = arith.mulf %79, %84 : vector<8x128xf32>
      %cst_45 = arith.constant dense<0.000000e+00> : vector<8xf32>
      %86 = vector.multi_reduction <add>, %85, %cst_45 [1] : vector<8x128xf32> to vector<8xf32>
      %87 = vector.shape_cast %86 : vector<8xf32> to vector<8x1xf32>
      %cst_46 = arith.constant 1.000000e+00 : f32
      %88 = vector.broadcast %cst_46 : f32 to vector<8x1xf32>
      %89 = arith.maximumf %87, %88 : vector<8x1xf32>
      %c16_i32_47 = arith.constant 16 : i32
      %90 = vector.broadcast %c16_i32_47 : i32 to vector<8x128xi32>
      %91 = arith.cmpi slt, %80, %90 : vector<8x128xi32>
      %92 = arith.extui %91 : vector<8x128xi1> to vector<8x128xi32>
      %93 = arith.sitofp %92 : vector<8x128xi32> to vector<8x128xf32>
      %94 = vector.broadcast %89 : vector<8x1xf32> to vector<8x128xf32>
      %95 = arith.divf %79, %94 : vector<8x128xf32>
      %96 = arith.mulf %95, %93 : vector<8x128xf32>
      %c0_48 = arith.constant 0 : index
      %c0_49 = arith.constant 0 : index
      %97 = vector.load %arg13[%c0_48, %c0_49] : memref<8x128xf32, #tpu.memory_space<vmem>>, vector<8x128xf32>
      tpu.vector_store %arg13[%c0_48, %c0_49], %96 {strides = array<i32>} : memref<8x128xf32, #tpu.memory_space<vmem>>, vector<8x128xf32>,
    } else {
    }
    return
  }
  func.func @transform_0(%arg0: i32) -> (i32, i32) {
    %c0_i32 = arith.constant 0 : i32
    %c0_i32_0 = arith.constant 0 : i32
    return %c0_i32, %arg0 : i32, i32
  }
  func.func @transform_1(%arg0: i32) -> (i32, i32) {
    %c0_i32 = arith.constant 0 : i32
    %c0_i32_0 = arith.constant 0 : i32
    return %arg0, %c0_i32 : i32, i32
  }
  func.func @transform_2(%arg0: i32) -> (i32, i32) {
    %c0_i32 = arith.constant 0 : i32
    %c0_i32_0 = arith.constant 0 : i32
    return %arg0, %c0_i32 : i32, i32
  }
  func.func @transform_3(%arg0: i32) -> (i32, i32) {
    %c0_i32 = arith.constant 0 : i32
    %c0_i32_0 = arith.constant 0 : i32
    %c0_i32_1 = arith.constant 0 : i32
    return %c0_i32, %c0_i32_0 : i32, i32
  }
  func.func @transform_4(%arg0: i32) -> (i32, i32) {
    %c0_i32 = arith.constant 0 : i32
    %c0_i32_0 = arith.constant 0 : i32
    %c0_i32_1 = arith.constant 0 : i32
    return %c0_i32, %c0_i32_0 : i32, i32
  }
  func.func @transform_5(%arg0: i32) -> (i32, i32) {
    %c0_i32 = arith.constant 0 : i32
    %c0_i32_0 = arith.constant 0 : i32
    %c0_i32_1 = arith.constant 0 : i32
    return %c0_i32, %c0_i32_0 : i32, i32
  }
  func.func @transform_6(%arg0: i32) -> (i32, i32) {
    %c0_i32 = arith.constant 0 : i32
    %c0_i32_0 = arith.constant 0 : i32
    %c0_i32_1 = arith.constant 0 : i32
    return %c0_i32, %c0_i32_0 : i32, i32
  }
  func.func @transform_7(%arg0: i32) -> (i32, i32) {
    %c0_i32 = arith.constant 0 : i32
    %c0_i32_0 = arith.constant 0 : i32
    %c0_i32_1 = arith.constant 0 : i32
    return %c0_i32, %c0_i32_0 : i32, i32
  }
  func.func @transform_8(%arg0: i32) -> (i32, i32) {
    %c0_i32 = arith.constant 0 : i32
    %c0_i32_0 = arith.constant 0 : i32
    %c0_i32_1 = arith.constant 0 : i32
    return %c0_i32, %c0_i32_0 : i32, i32
  }
  func.func @transform_9(%arg0: i32) -> (i32, i32) {
    %c0_i32 = arith.constant 0 : i32
    %c0_i32_0 = arith.constant 0 : i32
    %c0_i32_1 = arith.constant 0 : i32
    return %c0_i32, %c0_i32_0 : i32, i32
  }
  func.func @transform_10(%arg0: i32) -> (i32, i32) {
    %c0_i32 = arith.constant 0 : i32
    %c0_i32_0 = arith.constant 0 : i32
    %c0_i32_1 = arith.constant 0 : i32
    return %c0_i32, %c0_i32_0 : i32, i32
  }
  func.func @transform_11(%arg0: i32) -> (i32, i32) {
    %c0_i32 = arith.constant 0 : i32
    %c0_i32_0 = arith.constant 0 : i32
    %c0_i32_1 = arith.constant 0 : i32
    return %c0_i32, %c0_i32_0 : i32, i32
  }
  func.func @transform_12(%arg0: i32) -> (i32, i32) {
    %c0_i32 = arith.constant 0 : i32
    %c0_i32_0 = arith.constant 0 : i32
    %c0_i32_1 = arith.constant 0 : i32
    return %c0_i32, %c0_i32_0 : i32, i32
  }
}

</mosaic_0001>

<llo_original>
// kernel: node_model_forward.2
$region0: #{node_model_forward.2}
  #allocation0 [shape = 'u32[]', space=smem, size = 0x4, offset = 0x4, fixed_abs, tag = 'smem constant byte address 0x4 - core index']
  #allocation1 [shape = 'u32[144,128]{1,0:T(1,128)}', space=vmem, size = 0x12000, scoped, tag = 'internal scratch']
  %s0 = inlined_call_operand.vmem [shape: s32[1,16], index: 0, kind: input, shape index: {}]
  %s1 = inlined_call_operand.vmem [shape: bf16[16,16], index: 1, kind: input, shape index: {}]
  %s2 = inlined_call_operand.vmem [shape: bf16[16,16], index: 2, kind: input, shape index: {}]
  %s3 = inlined_call_operand.vmem [shape: bf16[16,32], index: 3, kind: input, shape index: {}]
  %s4 = inlined_call_operand.vmem [shape: bf16[16,32], index: 4, kind: input, shape index: {}]
  %s5 = inlined_call_operand.vmem [shape: f32[1,32], index: 5, kind: input, shape index: {}]
  %s6 = inlined_call_operand.vmem [shape: bf16[32,32], index: 6, kind: input, shape index: {}]
  %s7 = inlined_call_operand.vmem [shape: f32[1,32], index: 7, kind: input, shape index: {}]
  %s8 = inlined_call_operand.vmem [shape: bf16[32,128], index: 8, kind: input, shape index: {}]
  %s9 = inlined_call_operand.vmem [shape: f32[1,128], index: 9, kind: input, shape index: {}]
  %s10 = inlined_call_operand.vmem [shape: f32[1,128], index: 10, kind: input, shape index: {}]
  %s11 = inlined_call_operand.vmem [shape: f32[1,128], index: 11, kind: input, shape index: {}]
  %s12 = inlined_call_operand.vmem [shape: f32[8,128], index: 12, kind: output, shape index: {}]
  %s13 = sld [smem:[#allocation0]]
  $region66: #{node_model_forward.2} parent=0
    _
  %s15 = ssub.s32 1, %s13
  %s16 = scalar_select 0, %s15, %s13
  // Predicated region
  $region2: #{node_model_forward.2} parent=0 // pred_check
    _
  $region3: #{node_model_forward.2} parent=0 // pred_check_branch
    %18 = sbr.rel (0) target = $region5
  $region4: #{node_model_forward.2} parent=0 // pred_region
    _
  $region5: #{node_model_forward.2} parent=0 // pred_fallthru
    _
  // Predicated region
  $region6: #{node_model_forward.2} parent=0 // pred_check
    _
  $region7: #{node_model_forward.2} parent=0 // pred_check_branch
    %20 = sbr.rel (0) target = $region9
  $region8: #{node_model_forward.2} parent=0 // pred_region
    _
  $region9: #{node_model_forward.2} parent=0 // pred_fallthru
    _
  // Predicated region
  $region10: #{node_model_forward.2} parent=0 // pred_check
    _
  $region11: #{node_model_forward.2} parent=0 // pred_check_branch
    %22 = sbr.rel (0) target = $region13
  $region12: #{node_model_forward.2} parent=0 // pred_region
    _
  $region13: #{node_model_forward.2} parent=0 // pred_fallthru
    _
  // Predicated region
  $region14: #{node_model_forward.2} parent=0 // pred_check
    _
  $region15: #{node_model_forward.2} parent=0 // pred_check_branch
    %24 = sbr.rel (0) target = $region17
  $region16: #{node_model_forward.2} parent=0 // pred_region
    _
  $region17: #{node_model_forward.2} parent=0 // pred_fallthru
    _
  // Predicated region
  $region18: #{node_model_forward.2} parent=0 // pred_check
    _
  $region19: #{node_model_forward.2} parent=0 // pred_check_branch
    %26 = sbr.rel (0) target = $region21
  $region20: #{node_model_forward.2} parent=0 // pred_region
    _
  $region21: #{node_model_forward.2} parent=0 // pred_fallthru
    _
  // Predicated region
  $region22: #{node_model_forward.2} parent=0 // pred_check
    _
  $region23: #{node_model_forward.2} parent=0 // pred_check_branch
    %28 = sbr.rel (0) target = $region25
  $region24: #{node_model_forward.2} parent=0 // pred_region
    _
  $region25: #{node_model_forward.2} parent=0 // pred_fallthru
    _
  // Predicated region
  $region26: #{node_model_forward.2} parent=0 // pred_check
    _
  $region27: #{node_model_forward.2} parent=0 // pred_check_branch
    %30 = sbr.rel (0) target = $region29
  $region28: #{node_model_forward.2} parent=0 // pred_region
    _
  $region29: #{node_model_forward.2} parent=0 // pred_fallthru
    _
  // Predicated region
  $region30: #{node_model_forward.2} parent=0 // pred_check
    _
  $region31: #{node_model_forward.2} parent=0 // pred_check_branch
    %32 = sbr.rel (0) target = $region33
  $region32: #{node_model_forward.2} parent=0 // pred_region
    _
  $region33: #{node_model_forward.2} parent=0 // pred_fallthru
    _
  // Predicated region
  $region34: #{node_model_forward.2} parent=0 // pred_check
    _
  $region35: #{node_model_forward.2} parent=0 // pred_check_branch
    %34 = sbr.rel (0) target = $region37
  $region36: #{node_model_forward.2} parent=0 // pred_region
    _
  $region37: #{node_model_forward.2} parent=0 // pred_fallthru
    _
  // Predicated region
  $region38: #{node_model_forward.2} parent=0 // pred_check
    _
  $region39: #{node_model_forward.2} parent=0 // pred_check_branch
    %36 = sbr.rel (0) target = $region41
  $region40: #{node_model_forward.2} parent=0 // pred_region
    _
  $region41: #{node_model_forward.2} parent=0 // pred_fallthru
    _
  // Predicated region
  $region42: #{node_model_forward.2} parent=0 // pred_check
    _
  $region43: #{node_model_forward.2} parent=0 // pred_check_branch
    %38 = sbr.rel (0) target = $region45
  $region44: #{node_model_forward.2} parent=0 // pred_region
    _
  $region45: #{node_model_forward.2} parent=0 // pred_fallthru
    _
  // Predicated region
  $region46: #{node_model_forward.2} parent=0 // pred_check
    _
  $region47: #{node_model_forward.2} parent=0 // pred_check_branch
    %40 = sbr.rel (0) target = $region49
  $region48: #{node_model_forward.2} parent=0 // pred_region
    _
  $region49: #{node_model_forward.2} parent=0 // pred_fallthru
    _
  %p42 = scmp.eq.s32.totalorder 0, 0
  // Predicated region
  $region50: #{node_model_forward.2} parent=0 // pred_check
    %p43 = pneg %p42
  $region51: #{node_model_forward.2} parent=0 // pred_check_branch
    %45 = sbr.rel (%p43) target = $region53
  $region52: #{node_model_forward.2} parent=0 // pred_region
    %46 = vst [vmem:[%s12] sm:$0xff] 0.0
  $region53: #{node_model_forward.2} parent=0 // pred_fallthru
    _
  %v47 = vld [vmem:[%s1] sm:$0xf]
  %v48 = vld [vmem:[%s1 + $0x4] sm:$0xf]
  %v49 = vld [vmem:[%s2] sm:$0xf]
  %v50 = vld [vmem:[%s2 + $0x4] sm:$0xf]
  %v51 = vld [vmem:[%s3] sm:$0xf]
  %v52 = vld [vmem:[%s3 + $0x4] sm:$0xf]
  %v53 = vld [vmem:[%s4] sm:$0xf]
  %v54 = vld [vmem:[%s4 + $0x4] sm:$0xf]
  %v57 = vunpack.c.l.b16 %v49
  %v58 = vunpack.c.l.b16 %v50
  %v59 = vpack.c.b16 %v58, %v57
  %v62 = vunpack.c.l.b16 %v53
  %v63 = vunpack.c.l.b16 %v54
  %v64 = vpack.c.b16 %v63, %v62
  %vm66 = vcmask 130048
  %v68 = vsel %vm66, %v59, 0
  %70 = vmatprep.subr.bf16.mxu0 0
  %71 = vmatpush1.bf16.msra.mxu0 %v64
  %72 = vmatprep.subr.bf16.mxu0 0
  %73 = vmatpush1.bf16.msra.mxu0 0
  %74 = vmatprep.subr.bf16.mxu0 0
  %75 = vmatpush1.bf16.msra.mxu0 0
  %76 = vmatprep.subr.bf16.mxu0 0
  %77 = vmatpush1.bf16.msra.mxu0 0
  %78 = vmatprep.subr.bf16.mxu0 0
  %79 = vmatpush1.bf16.msra.mxu0 0
  %80 = vmatprep.subr.bf16.mxu0 0
  %81 = vmatpush1.bf16.msra.mxu0 0
  %82 = vmatprep.subr.bf16.mxu0 0
  %83 = vmatpush1.bf16.msra.mxu0 0
  %84 = vmatprep.subr.bf16.mxu0 0
  %85 = vmatpush1.bf16.msra.mxu0 0
  %86 = vmatprep.subr.bf16.mxu0 0
  %87 = vmatpush1.bf16.msra.mxu0 0
  %88 = vmatprep.subr.bf16.mxu0 0
  %89 = vmatpush1.bf16.msra.mxu0 0
  %90 = vmatprep.subr.bf16.mxu0 0
  %91 = vmatpush1.bf16.msra.mxu0 0
  %92 = vmatprep.subr.bf16.mxu0 0
  %93 = vmatpush1.bf16.msra.mxu0 0
  %94 = vmatprep.subr.bf16.mxu0 0
  %95 = vmatpush1.bf16.msra.mxu0 0
  %96 = vmatprep.subr.bf16.mxu0 0
  %97 = vmatpush1.bf16.msra.mxu0 0
  %98 = vmatprep.subr.bf16.mxu0 0
  %99 = vmatpush1.bf16.msra.mxu0 0
  %100 = vmatprep.subr.bf16.mxu0 0
  %101 = vmatpush1.bf16.msra.mxu0 0
  %102 = vmatprep.mubr.bf16.mxu0 0
  %103 = vmatmul.mubr.bf16.gmra.mrb[0].mxu0 %v68
  %v104 = vpop.f32.mrb[0].mxu0
  %v105 = vadd.f32 0.0, %v104
  %v106 = vpop.f32.mrb[0].mxu0
  %v107 = vpop.f32.mrb[0].mxu0
  %v108 = vadd.f32 0.0, %v107
  %v109 = vpop.f32.mrb[0].mxu0
  %110 = vdwg.mxu0
  %v113 = vunpack.c.l.b16 %v47
  %v114 = vunpack.c.l.b16 %v48
  %v115 = vpack.c.b16 %v114, %v113
  %v118 = vunpack.c.l.b16 %v51
  %v119 = vunpack.c.l.b16 %v52
  %v120 = vpack.c.b16 %v119, %v118
  %v123 = vsel %vm66, %v115, 0
  %125 = vmatprep.subr.bf16.mxu0 0
  %126 = vmatpush1.bf16.msra.mxu0 %v120
  %127 = vmatprep.subr.bf16.mxu0 0
  %128 = vmatpush1.bf16.msra.mxu0 0
  %129 = vmatprep.subr.bf16.mxu0 0
  %130 = vmatpush1.bf16.msra.mxu0 0
  %131 = vmatprep.subr.bf16.mxu0 0
  %132 = vmatpush1.bf16.msra.mxu0 0
  %133 = vmatprep.subr.bf16.mxu0 0
  %134 = vmatpush1.bf16.msra.mxu0 0
  %135 = vmatprep.subr.bf16.mxu0 0
  %136 = vmatpush1.bf16.msra.mxu0 0
  %137 = vmatprep.subr.bf16.mxu0 0
  %138 = vmatpush1.bf16.msra.mxu0 0
  %139 = vmatprep.subr.bf16.mxu0 0
  %140 = vmatpush1.bf16.msra.mxu0 0
  %141 = vmatprep.subr.bf16.mxu0 0
  %142 = vmatpush1.bf16.msra.mxu0 0
  %143 = vmatprep.subr.bf16.mxu0 0
  %144 = vmatpush1.bf16.msra.mxu0 0
  %145 = vmatprep.subr.bf16.mxu0 0
  %146 = vmatpush1.bf16.msra.mxu0 0
  %147 = vmatprep.subr.bf16.mxu0 0
  %148 = vmatpush1.bf16.msra.mxu0 0
  %149 = vmatprep.subr.bf16.mxu0 0
  %150 = vmatpush1.bf16.msra.mxu0 0
  %151 = vmatprep.subr.bf16.mxu0 0
  %152 = vmatpush1.bf16.msra.mxu0 0
  %153 = vmatprep.subr.bf16.mxu0 0
  %154 = vmatpush1.bf16.msra.mxu0 0
  %155 = vmatprep.subr.bf16.mxu0 0
  %156 = vmatpush1.bf16.msra.mxu0 0
  %157 = vmatprep.mubr.bf16.mxu0 0
  %158 = vmatmul.mubr.bf16.gmra.mrb[0].mxu0 %v123
  %v159 = vpop.f32.mrb[0].mxu0
  %v160 = vadd.f32 %v105, %v159
  %v161 = vpop.f32.mrb[0].mxu0
  %v162 = vpop.f32.mrb[0].mxu0
  %v163 = vadd.f32 %v108, %v162
  %v164 = vpop.f32.mrb[0].mxu0
  %165 = vdwg.mxu0
  %v166 = vld [vmem:[%s5] sm:$0x1]
  %v168 = vlaneseq
  %v169 = vshrl.u32 %v168, 7
  %v170 = vsub.s32 0, %v169
  %v171 = vrot.slane %v166, %v170
  %v173 = vadd.f32 %v160, %v171
  %v174 = vadd.f32 %v163, %v171
  %v175 = vmax.f32 %v173, 0.0
  %v176 = vmax.f32 %v174, 0.0
  %v177 = vld [vmem:[%s6] sm:$0xf]
  %v178 = vld [vmem:[%s6 + $0x4] sm:$0xf]
  %v179 = vld [vmem:[%s6 + $0x8] sm:$0xf]
  %v180 = vld [vmem:[%s6 + $0xc] sm:$0xf]
  %v181 = vld [vmem:[%s7] sm:$0x1]
  %v182 = vpack.c.bf16 %v176, %v175
  %v184 = vlaneseq
  %v185 = vshrl.u32 %v184, 7
  %v186 = vsub.s32 0, %v185
  %v187 = vrot.slane %v181, %v186
  %v193 = vunpack.c.l.b16 %v177
  %v194 = vunpack.c.l.b16 %v178
  %v195 = vunpack.c.l.b16 %v179
  %v196 = vunpack.c.l.b16 %v180
  %v197 = vpack.c.b16 %v194, %v193
  %v198 = vpack.c.b16 %v196, %v195
  %vm201 = vcmask 261120
  %v203 = vsel %vm201, %v182, 0
  %205 = vmatprep.subr.bf16.mxu0 0
  %206 = vmatpush1.bf16.msra.mxu0 %v197
  %207 = vmatprep.subr.bf16.mxu0 0
  %208 = vmatpush1.bf16.msra.mxu0 %v198
  %209 = vmatprep.subr.bf16.mxu0 0
  %210 = vmatpush1.bf16.msra.mxu0 0
  %211 = vmatprep.subr.bf16.mxu0 0
  %212 = vmatpush1.bf16.msra.mxu0 0
  %213 = vmatprep.subr.bf16.mxu0 0
  %214 = vmatpush1.bf16.msra.mxu0 0
  %215 = vmatprep.subr.bf16.mxu0 0
  %216 = vmatpush1.bf16.msra.mxu0 0
  %217 = vmatprep.subr.bf16.mxu0 0
  %218 = vmatpush1.bf16.msra.mxu0 0
  %219 = vmatprep.subr.bf16.mxu0 0
  %220 = vmatpush1.bf16.msra.mxu0 0
  %221 = vmatprep.subr.bf16.mxu0 0
  %222 = vmatpush1.bf16.msra.mxu0 0
  %223 = vmatprep.subr.bf16.mxu0 0
  %224 = vmatpush1.bf16.msra.mxu0 0
  %225 = vmatprep.subr.bf16.mxu0 0
  %226 = vmatpush1.bf16.msra.mxu0 0
  %227 = vmatprep.subr.bf16.mxu0 0
  %228 = vmatpush1.bf16.msra.mxu0 0
  %229 = vmatprep.subr.bf16.mxu0 0
  %230 = vmatpush1.bf16.msra.mxu0 0
  %231 = vmatprep.subr.bf16.mxu0 0
  %232 = vmatpush1.bf16.msra.mxu0 0
  %233 = vmatprep.subr.bf16.mxu0 0
  %234 = vmatpush1.bf16.msra.mxu0 0
  %235 = vmatprep.subr.bf16.mxu0 0
  %236 = vmatpush1.bf16.msra.mxu0 0
  %237 = vmatprep.mubr.bf16.mxu0 0
  %238 = vmatmul.mubr.bf16.gmra.mrb[0].mxu0 %v203
  %v239 = vpop.f32.mrb[0].mxu0
  %v240 = vadd.f32 %v187, %v239
  %v241 = vpop.f32.mrb[0].mxu0
  %v242 = vpop.f32.mrb[0].mxu0
  %v243 = vadd.f32 %v187, %v242
  %v244 = vpop.f32.mrb[0].mxu0
  %245 = vdwg.mxu0
  %v246 = vmax.f32 %v240, 0.0
  %v247 = vmax.f32 %v243, 0.0
  %v248 = vld [vmem:[%s8] sm:$0xf]
  %v249 = vld [vmem:[%s8 + $0x4] sm:$0xf]
  %v250 = vld [vmem:[%s8 + $0x8] sm:$0xf]
  %v251 = vld [vmem:[%s8 + $0xc] sm:$0xf]
  %v252 = vld [vmem:[%s9] sm:$0x1]
  %v253 = vpack.c.bf16 %v247, %v246
  %v255 = vlaneseq
  %v256 = vshrl.u32 %v255, 7
  %v257 = vsub.s32 0, %v256
  %v258 = vrot.slane %v252, %v257
  %v264 = vunpack.c.l.b16 %v248
  %v265 = vunpack.c.l.b16 %v249
  %v266 = vunpack.c.l.b16 %v250
  %v267 = vunpack.c.l.b16 %v251
  %v268 = vpack.c.b16 %v265, %v264
  %v269 = vpack.c.b16 %v267, %v266
  %v273 = vsel %vm201, %v253, 0
  %275 = vmatprep.subr.bf16.mxu0 0
  %276 = vmatpush1.bf16.msra.mxu0 %v268
  %277 = vmatprep.subr.bf16.mxu0 0
  %278 = vmatpush1.bf16.msra.mxu0 %v269
  %279 = vmatprep.subr.bf16.mxu0 0
  %280 = vmatpush1.bf16.msra.mxu0 0
  %281 = vmatprep.subr.bf16.mxu0 0
  %282 = vmatpush1.bf16.msra.mxu0 0
  %283 = vmatprep.subr.bf16.mxu0 0
  %284 = vmatpush1.bf16.msra.mxu0 0
  %285 = vmatprep.subr.bf16.mxu0 0
  %286 = vmatpush1.bf16.msra.mxu0 0
  %287 = vmatprep.subr.bf16.mxu0 0
  %288 = vmatpush1.bf16.msra.mxu0 0
  %289 = vmatprep.subr.bf16.mxu0 0
  %290 = vmatpush1.bf16.msra.mxu0 0
  %291 = vmatprep.subr.bf16.mxu0 0
  %292 = vmatpush1.bf16.msra.mxu0 0
  %293 = vmatprep.subr.bf16.mxu0 0
  %294 = vmatpush1.bf16.msra.mxu0 0
  %295 = vmatprep.subr.bf16.mxu0 0
  %296 = vmatpush1.bf16.msra.mxu0 0
  %297 = vmatprep.subr.bf16.mxu0 0
  %298 = vmatpush1.bf16.msra.mxu0 0
  %299 = vmatprep.subr.bf16.mxu0 0
  %300 = vmatpush1.bf16.msra.mxu0 0
  %301 = vmatprep.subr.bf16.mxu0 0
  %302 = vmatpush1.bf16.msra.mxu0 0
  %303 = vmatprep.subr.bf16.mxu0 0
  %304 = vmatpush1.bf16.msra.mxu0 0
  %305 = vmatprep.subr.bf16.mxu0 0
  %306 = vmatpush1.bf16.msra.mxu0 0
  %307 = vmatprep.mubr.bf16.mxu0 0
  %308 = vmatmul.mubr.bf16.gmra.mrb[0].mxu0 %v273
  %v309 = vpop.f32.mrb[0].mxu0
  %v310 = vadd.f32 %v258, %v309
  %v311 = vpop.f32.mrb[0].mxu0
  %v312 = vpop.f32.mrb[0].mxu0
  %v313 = vadd.f32 %v258, %v312
  %v314 = vpop.f32.mrb[0].mxu0
  %315 = vdwg.mxu0
  %v316 = vlaneseq
  %v317 = vand.u32 %v316, 127
  %vm318 = vcmp.lt.s32.totalorder %v317, 16
  %v319 = vsel %vm318, 1, 0
  %v320 = vcvt.s32.f32 %v319
  %v321 = vmul.f32 %v310, %v320
  %v322 = vmul.f32 %v313, %v320
  %323 = vadd.xlane.f32.xlu0 %v321
  %v324 = vpop.xlane.xlu0 %323
  %325 = vadd.xlane.f32.xlu0 %v322
  %v326 = vpop.xlane.xlu0 %325
  %v327 = vmul.f32 %v324, 0.0625
  %v328 = vmul.f32 %v326, 0.0625
  %v329 = vsub.f32 %v310, %v327
  %v330 = vsub.f32 %v313, %v328
  %v331 = vmul.f32 %v329, %v320
  %v332 = vmul.f32 %v330, %v320
  %v333 = vmul.f32 %v331, %v331
  %v334 = vmul.f32 %v332, %v332
  %335 = vadd.xlane.f32.xlu0 %v333
  %v336 = vpop.xlane.xlu0 %335
  %337 = vadd.xlane.f32.xlu0 %v334
  %v338 = vpop.xlane.xlu0 %337
  %v339 = vmul.f32 %v336, 0.0625
  %v340 = vmul.f32 %v338, 0.0625
  %v341 = vadd.f32 %v339, 1e-05
  %v342 = vadd.f32 %v340, 1e-05
  %v343 = vrsqrt.pop %v341
  %v344 = vrsqrt.pop %v342
  %v345 = vmul.f32 %v331, %v343
  %v346 = vmul.f32 %v332, %v344
  %v347 = vld [vmem:[%s10] sm:$0x1]
  %v349 = vlaneseq
  %v350 = vshrl.u32 %v349, 7
  %v351 = vsub.s32 0, %v350
  %v352 = vrot.slane %v347, %v351
  %v354 = vmul.f32 %v345, %v352
  %v355 = vmul.f32 %v346, %v352
  %v356 = vld [vmem:[%s11] sm:$0x1]
  %v358 = vlaneseq
  %v359 = vshrl.u32 %v358, 7
  %v360 = vsub.s32 0, %v359
  %v361 = vrot.slane %v356, %v360
  %v363 = vadd.f32 %v354, %v361
  %v364 = vadd.f32 %v355, %v361
  %vm365 = vcmp.eq.s32.totalorder %v317, 16
  %v366 = vsel %vm365, 1, 0
  %v367 = vcvt.s32.f32 %v366
  %v368 = vadd.f32 %v363, %v367
  %v369 = vadd.f32 %v364, %v367
  %v370 = vld [vmem:[%s0] sm:$0x1]
  %v371 = vlaneseq
  %v372 = vshrl.u32 %v371, 7
  %v373 = vlaneseq
  %v374 = vshrl.u32 %v373, 7
  %v375 = vsub.s32 0, %v374
  %v376 = vrot.slane %v370, %v375
  %vm377 = vcmp.eq.s32.totalorder %v372, %v376
  %v378 = vsel %vm377, 1, 0
  %v379 = vcvt.s32.f32 %v378
  %v380 = vpack.c.bf16 %v379, %v379
  %v381 = vld [vmem:[%s12] sm:$0xff]
  %v382 = vpack.c.bf16 %v369, %v368
  %v384 = vsel %vm66, %v380, 0
  %386 = vmatprep.subr.bf16.mxu0 0
  %387 = vmatpush1.bf16.msra.mxu0 %v382
  %388 = vmatprep.subr.bf16.mxu0 0
  %389 = vmatpush1.bf16.msra.mxu0 0
  %390 = vmatprep.subr.bf16.mxu0 0
  %391 = vmatpush1.bf16.msra.mxu0 0
  %392 = vmatprep.subr.bf16.mxu0 0
  %393 = vmatpush1.bf16.msra.mxu0 0
  %394 = vmatprep.subr.bf16.mxu0 0
  %395 = vmatpush1.bf16.msra.mxu0 0
  %396 = vmatprep.subr.bf16.mxu0 0
  %397 = vmatpush1.bf16.msra.mxu0 0
  %398 = vmatprep.subr.bf16.mxu0 0
  %399 = vmatpush1.bf16.msra.mxu0 0
  %400 = vmatprep.subr.bf16.mxu0 0
  %401 = vmatpush1.bf16.msra.mxu0 0
  %402 = vmatprep.subr.bf16.mxu0 0
  %403 = vmatpush1.bf16.msra.mxu0 0
  %404 = vmatprep.subr.bf16.mxu0 0
  %405 = vmatpush1.bf16.msra.mxu0 0
  %406 = vmatprep.subr.bf16.mxu0 0
  %407 = vmatpush1.bf16.msra.mxu0 0
  %408 = vmatprep.subr.bf16.mxu0 0
  %409 = vmatpush1.bf16.msra.mxu0 0
  %410 = vmatprep.subr.bf16.mxu0 0
  %411 = vmatpush1.bf16.msra.mxu0 0
  %412 = vmatprep.subr.bf16.mxu0 0
  %413 = vmatpush1.bf16.msra.mxu0 0
  %414 = vmatprep.subr.bf16.mxu0 0
  %415 = vmatpush1.bf16.msra.mxu0 0
  %416 = vmatprep.subr.bf16.mxu0 0
  %417 = vmatpush1.bf16.msra.mxu0 0
  %418 = vmatprep.mubr.bf16.mxu0 0
  %419 = vmatmul.mubr.bf16.gmra.mrb[0].mxu0 %v384
  %v420 = vpop.f32.mrb[0].mxu0
  %v421 = vadd.f32 0.0, %v420
  %v422 = vpop.f32.mrb[0].mxu0
  %v423 = vpop.f32.mrb[0].mxu0
  %v424 = vpop.f32.mrb[0].mxu0
  %425 = vdwg.mxu0
  %v426 = vadd.f32 %v381, %v421
  %427 = vst [vmem:[%s12] sm:$0xff] %v426
  // Predicated region
  $region54: #{node_model_forward.2} parent=0 // pred_check
    %p428 = pneg %p42
  $region55: #{node_model_forward.2} parent=0 // pred_check_branch
    %430 = sbr.rel (%p428) target = $region57
  $region56: #{node_model_forward.2} parent=0 // pred_region
    %v431 = vld [vmem:[%s12] sm:$0xff]
    %v432 = vmul.f32 %v431, %v367
    %433 = vadd.xlane.f32.xlu0 %v432
    %v434 = vpop.xlane.xlu0 %433
    %v435 = vmax.f32 %v434, 1.0
    %v436 = vrcp.pop %v435
    %v437 = vmul.f32 %v431, %v436
    %v438 = vmul.f32 %v437, %v320
    %439 = vst [vmem:[%s12] sm:$0xff] %v438
  $region57: #{node_model_forward.2} parent=0 // pred_fallthru
    _
  // Predicated region
  $region58: #{node_model_forward.2} parent=0 // pred_check
    _
  $region59: #{node_model_forward.2} parent=0 // pred_check_branch
    %441 = sbr.rel (0) target = $region61
  $region60: #{node_model_forward.2} parent=0 // pred_region
    _
  $region61: #{node_model_forward.2} parent=0 // pred_fallthru
    _
  // Predicated region
  $region62: #{node_model_forward.2} parent=0 // pred_check
    _
  $region63: #{node_model_forward.2} parent=0 // pred_check_branch
    %443 = sbr.rel (0) target = $region65
  $region64: #{node_model_forward.2} parent=0 // pred_region
    _
  $region65: #{node_model_forward.2} parent=0 // pred_fallthru
    _

// kernel: node_model_forward.3
$region0: #{node_model_forward.3}
  #allocation0 [shape = 'u32[]', space=smem, size = 0x4, offset = 0x4, fixed_abs, tag = 'smem constant byte address 0x4 - core index']
  #allocation1 [shape = 'u32[144,128]{1,0:T(1,128)}', space=vmem, size = 0x12000, scoped, tag = 'internal scratch']
  %s0 = inlined_call_operand.vmem [shape: bf16[8,16], index: 0, kind: input, shape index: {}]
  %s1 = inlined_call_operand.vmem [shape: f32[8,128], index: 1, kind: input, shape index: {}]
  %s2 = inlined_call_operand.vmem [shape: bf16[16,32], index: 2, kind: input, shape index: {}]
  %s3 = inlined_call_operand.vmem [shape: bf16[128,32], index: 3, kind: input, shape index: {}]
  %s4 = inlined_call_operand.vmem [shape: f32[1,32], index: 4, kind: input, shape index: {}]
  %s5 = inlined_call_operand.vmem [shape: bf16[32,32], index: 5, kind: input, shape index: {}]
  %s6 = inlined_call_operand.vmem [shape: f32[1,32], index: 6, kind: input, shape index: {}]
  %s7 = inlined_call_operand.vmem [shape: bf16[32,128], index: 7, kind: input, shape index: {}]
  %s8 = inlined_call_operand.vmem [shape: f32[1,128], index: 8, kind: input, shape index: {}]
  %s9 = inlined_call_operand.vmem [shape: f32[1,128], index: 9, kind: input, shape index: {}]
  %s10 = inlined_call_operand.vmem [shape: f32[1,128], index: 10, kind: input, shape index: {}]
  %s11 = inlined_call_operand.hbm [shape: f32[8,128], index: 11, kind: output, shape index: {}]
  %s12 = sld [smem:[#allocation0]]
  $region54: #{node_model_forward.3} parent=0
    _
  %s14 = ssub.s32 1, %s12
  %s15 = scalar_select 0, %s14, %s12
  $region1: #{node_model_forward.3} parent=0
    #allocation2 [shape = 'u8[4096]{0}', space=vmem, size = 0x1000, scoped, tag = 'output window, operand 0, single buffered']
    #allocation3 [shape = 's32[1]{0}', space=sflag, size = 0x4, scoped, tag = 'scoped memory for node_model_forward.3']
    %16 = vsyncpa [#allocation3], 0
    // Predicated region
    $region2: #{node_model_forward.3} parent=1 // pred_check
      _
    $region3: #{node_model_forward.3} parent=1 // pred_check_branch
      %18 = sbr.rel (0) target = $region5
    $region4: #{node_model_forward.3} parent=1 // pred_region
      _
    $region5: #{node_model_forward.3} parent=1 // pred_fallthru
      _
    // Predicated region
    $region6: #{node_model_forward.3} parent=1 // pred_check
      _
    $region7: #{node_model_forward.3} parent=1 // pred_check_branch
      %20 = sbr.rel (0) target = $region9
    $region8: #{node_model_forward.3} parent=1 // pred_region
      _
    $region9: #{node_model_forward.3} parent=1 // pred_fallthru
      _
    // Predicated region
    $region10: #{node_model_forward.3} parent=1 // pred_check
      _
    $region11: #{node_model_forward.3} parent=1 // pred_check_branch
      %22 = sbr.rel (0) target = $region13
    $region12: #{node_model_forward.3} parent=1 // pred_region
      _
    $region13: #{node_model_forward.3} parent=1 // pred_fallthru
      _
    // Predicated region
    $region14: #{node_model_forward.3} parent=1 // pred_check
      _
    $region15: #{node_model_forward.3} parent=1 // pred_check_branch
      %24 = sbr.rel (0) target = $region17
    $region16: #{node_model_forward.3} parent=1 // pred_region
      _
    $region17: #{node_model_forward.3} parent=1 // pred_fallthru
      _
    // Predicated region
    $region18: #{node_model_forward.3} parent=1 // pred_check
      _
    $region19: #{node_model_forward.3} parent=1 // pred_check_branch
      %26 = sbr.rel (0) target = $region21
    $region20: #{node_model_forward.3} parent=1 // pred_region
      _
    $region21: #{node_model_forward.3} parent=1 // pred_fallthru
      _
    // Predicated region
    $region22: #{node_model_forward.3} parent=1 // pred_check
      _
    $region23: #{node_model_forward.3} parent=1 // pred_check_branch
      %28 = sbr.rel (0) target = $region25
    $region24: #{node_model_forward.3} parent=1 // pred_region
      _
    $region25: #{node_model_forward.3} parent=1 // pred_fallthru
      _
    // Predicated region
    $region26: #{node_model_forward.3} parent=1 // pred_check
      _
    $region27: #{node_model_forward.3} parent=1 // pred_check_branch
      %30 = sbr.rel (0) target = $region29
    $region28: #{node_model_forward.3} parent=1 // pred_region
      _
    $region29: #{node_model_forward.3} parent=1 // pred_fallthru
      _
    // Predicated region
    $region30: #{node_model_forward.3} parent=1 // pred_check
      _
    $region31: #{node_model_forward.3} parent=1 // pred_check_branch
      %32 = sbr.rel (0) target = $region33
    $region32: #{node_model_forward.3} parent=1 // pred_region
      _
    $region33: #{node_model_forward.3} parent=1 // pred_fallthru
      _
    // Predicated region
    $region34: #{node_model_forward.3} parent=1 // pred_check
      _
    $region35: #{node_model_forward.3} parent=1 // pred_check_branch
      %34 = sbr.rel (0) target = $region37
    $region36: #{node_model_forward.3} parent=1 // pred_region
      _
    $region37: #{node_model_forward.3} parent=1 // pred_fallthru
      _
    // Predicated region
    $region38: #{node_model_forward.3} parent=1 // pred_check
      _
    $region39: #{node_model_forward.3} parent=1 // pred_check_branch
      %36 = sbr.rel (0) target = $region41
    $region40: #{node_model_forward.3} parent=1 // pred_region
      _
    $region41: #{node_model_forward.3} parent=1 // pred_fallthru
      _
    // Predicated region
    $region42: #{node_model_forward.3} parent=1 // pred_check
      _
    $region43: #{node_model_forward.3} parent=1 // pred_check_branch
      %38 = sbr.rel (0) target = $region45
    $region44: #{node_model_forward.3} parent=1 // pred_region
      _
    $region45: #{node_model_forward.3} parent=1 // pred_fallthru
      _
    %v40 = vld [vmem:[%s0] sm:$0xf]
    %v41 = vld [vmem:[%s1] sm:$0xff]
    %v42 = vld [vmem:[%s2] sm:$0xf]
    %v43 = vld [vmem:[%s2 + $0x4] sm:$0xf]
    %v44 = vpack.c.bf16 %v41, %v41
    %v45 = vld [vmem:[%s3] sm:$0xf]
    %v46 = vld [vmem:[%s3 + $0x4] sm:$0xf]
    %v47 = vld [vmem:[%s3 + $0x8] sm:$0xf]
    %v48 = vld [vmem:[%s3 + $0xc] sm:$0xf]
    %v49 = vld [vmem:[%s3 + $0x10] sm:$0xf]
    %v50 = vld [vmem:[%s3 + $0x14] sm:$0xf]
    %v51 = vld [vmem:[%s3 + $0x18] sm:$0xf]
    %v52 = vld [vmem:[%s3 + $0x1c] sm:$0xf]
    %v53 = vld [vmem:[%s3 + $0x20] sm:$0xf]
    %v54 = vld [vmem:[%s3 + $0x24] sm:$0xf]
    %v55 = vld [vmem:[%s3 + $0x28] sm:$0xf]
    %v56 = vld [vmem:[%s3 + $0x2c] sm:$0xf]
    %v57 = vld [vmem:[%s3 + $0x30] sm:$0xf]
    %v58 = vld [vmem:[%s3 + $0x34] sm:$0xf]
    %v59 = vld [vmem:[%s3 + $0x38] sm:$0xf]
    %v60 = vld [vmem:[%s3 + $0x3c] sm:$0xf]
    %v77 = vunpack.c.l.b16 %v45
    %v78 = vunpack.c.l.b16 %v46
    %v79 = vunpack.c.l.b16 %v47
    %v80 = vunpack.c.l.b16 %v48
    %v81 = vunpack.c.l.b16 %v49
    %v82 = vunpack.c.l.b16 %v50
    %v83 = vunpack.c.l.b16 %v51
    %v84 = vunpack.c.l.b16 %v52
    %v85 = vunpack.c.l.b16 %v53
    %v86 = vunpack.c.l.b16 %v54
    %v87 = vunpack.c.l.b16 %v55
    %v88 = vunpack.c.l.b16 %v56
    %v89 = vunpack.c.l.b16 %v57
    %v90 = vunpack.c.l.b16 %v58
    %v91 = vunpack.c.l.b16 %v59
    %v92 = vunpack.c.l.b16 %v60
    %v93 = vpack.c.b16 %v78, %v77
    %v94 = vpack.c.b16 %v80, %v79
    %v95 = vpack.c.b16 %v82, %v81
    %v96 = vpack.c.b16 %v84, %v83
    %v97 = vpack.c.b16 %v86, %v85
    %v98 = vpack.c.b16 %v88, %v87
    %v99 = vpack.c.b16 %v90, %v89
    %v100 = vpack.c.b16 %v92, %v91
    %109 = vmatprep.subr.bf16.mxu0 0
    %110 = vmatpush1.bf16.msra.mxu0 %v93
    %111 = vmatprep.subr.bf16.mxu0 0
    %112 = vmatpush1.bf16.msra.mxu0 %v94
    %113 = vmatprep.subr.bf16.mxu0 0
    %114 = vmatpush1.bf16.msra.mxu0 %v95
    %115 = vmatprep.subr.bf16.mxu0 0
    %116 = vmatpush1.bf16.msra.mxu0 %v96
    %117 = vmatprep.subr.bf16.mxu0 0
    %118 = vmatpush1.bf16.msra.mxu0 %v97
    %119 = vmatprep.subr.bf16.mxu0 0
    %120 = vmatpush1.bf16.msra.mxu0 %v98
    %121 = vmatprep.subr.bf16.mxu0 0
    %122 = vmatpush1.bf16.msra.mxu0 %v99
    %123 = vmatprep.subr.bf16.mxu0 0
    %124 = vmatpush1.bf16.msra.mxu0 %v100
    %125 = vmatprep.subr.bf16.mxu0 0
    %126 = vmatpush1.bf16.msra.mxu0 0
    %127 = vmatprep.subr.bf16.mxu0 0
    %128 = vmatpush1.bf16.msra.mxu0 0
    %129 = vmatprep.subr.bf16.mxu0 0
    %130 = vmatpush1.bf16.msra.mxu0 0
    %131 = vmatprep.subr.bf16.mxu0 0
    %132 = vmatpush1.bf16.msra.mxu0 0
    %133 = vmatprep.subr.bf16.mxu0 0
    %134 = vmatpush1.bf16.msra.mxu0 0
    %135 = vmatprep.subr.bf16.mxu0 0
    %136 = vmatpush1.bf16.msra.mxu0 0
    %137 = vmatprep.subr.bf16.mxu0 0
    %138 = vmatpush1.bf16.msra.mxu0 0
    %139 = vmatprep.subr.bf16.mxu0 0
    %140 = vmatpush1.bf16.msra.mxu0 0
    %141 = vmatprep.mubr.bf16.mxu0 0
    %142 = vmatmul.mubr.bf16.gmra.mrb[0].mxu0 %v44
    %v143 = vpop.f32.mrb[0].mxu0
    %v144 = vadd.f32 0.0, %v143
    %v145 = vpop.f32.mrb[0].mxu0
    %v146 = vpop.f32.mrb[0].mxu0
    %v147 = vpop.f32.mrb[0].mxu0
    %148 = vdwg.mxu0
    %v151 = vunpack.c.l.b16 %v42
    %v152 = vunpack.c.l.b16 %v43
    %v153 = vpack.c.b16 %v152, %v151
    %vm155 = vcmask 130048
    %v157 = vsel %vm155, %v40, 0
    %159 = vmatprep.subr.bf16.mxu0 0
    %160 = vmatpush1.bf16.msra.mxu0 %v153
    %161 = vmatprep.subr.bf16.mxu0 0
    %162 = vmatpush1.bf16.msra.mxu0 0
    %163 = vmatprep.subr.bf16.mxu0 0
    %164 = vmatpush1.bf16.msra.mxu0 0
    %165 = vmatprep.subr.bf16.mxu0 0
    %166 = vmatpush1.bf16.msra.mxu0 0
    %167 = vmatprep.subr.bf16.mxu0 0
    %168 = vmatpush1.bf16.msra.mxu0 0
    %169 = vmatprep.subr.bf16.mxu0 0
    %170 = vmatpush1.bf16.msra.mxu0 0
    %171 = vmatprep.subr.bf16.mxu0 0
    %172 = vmatpush1.bf16.msra.mxu0 0
    %173 = vmatprep.subr.bf16.mxu0 0
    %174 = vmatpush1.bf16.msra.mxu0 0
    %175 = vmatprep.subr.bf16.mxu0 0
    %176 = vmatpush1.bf16.msra.mxu0 0
    %177 = vmatprep.subr.bf16.mxu0 0
    %178 = vmatpush1.bf16.msra.mxu0 0
    %179 = vmatprep.subr.bf16.mxu0 0
    %180 = vmatpush1.bf16.msra.mxu0 0
    %181 = vmatprep.subr.bf16.mxu0 0
    %182 = vmatpush1.bf16.msra.mxu0 0
    %183 = vmatprep.subr.bf16.mxu0 0
    %184 = vmatpush1.bf16.msra.mxu0 0
    %185 = vmatprep.subr.bf16.mxu0 0
    %186 = vmatpush1.bf16.msra.mxu0 0
    %187 = vmatprep.subr.bf16.mxu0 0
    %188 = vmatpush1.bf16.msra.mxu0 0
    %189 = vmatprep.subr.bf16.mxu0 0
    %190 = vmatpush1.bf16.msra.mxu0 0
    %191 = vmatprep.mubr.bf16.mxu0 0
    %192 = vmatmul.mubr.bf16.gmra.mrb[0].mxu0 %v157
    %v193 = vpop.f32.mrb[0].mxu0
    %v194 = vadd.f32 %v144, %v193
    %v195 = vpop.f32.mrb[0].mxu0
    %v196 = vpop.f32.mrb[0].mxu0
    %v197 = vpop.f32.mrb[0].mxu0
    %198 = vdwg.mxu0
    %v199 = vld [vmem:[%s4] sm:$0x1]
    %v201 = vlaneseq
    %v202 = vshrl.u32 %v201, 7
    %v203 = vsub.s32 0, %v202
    %v204 = vrot.slane %v199, %v203
    %v206 = vadd.f32 %v194, %v204
    %v207 = vmax.f32 %v206, 0.0
    %v208 = vld [vmem:[%s5] sm:$0xf]
    %v209 = vld [vmem:[%s5 + $0x4] sm:$0xf]
    %v210 = vld [vmem:[%s5 + $0x8] sm:$0xf]
    %v211 = vld [vmem:[%s5 + $0xc] sm:$0xf]
    %v212 = vld [vmem:[%s6] sm:$0x1]
    %v213 = vpack.c.bf16 %v207, %v207
    %v215 = vlaneseq
    %v216 = vshrl.u32 %v215, 7
    %v217 = vsub.s32 0, %v216
    %v218 = vrot.slane %v212, %v217
    %v224 = vunpack.c.l.b16 %v208
    %v225 = vunpack.c.l.b16 %v209
    %v226 = vunpack.c.l.b16 %v210
    %v227 = vunpack.c.l.b16 %v211
    %v228 = vpack.c.b16 %v225, %v224
    %v229 = vpack.c.b16 %v227, %v226
    %vm232 = vcmask 261120
    %v234 = vsel %vm232, %v213, 0
    %236 = vmatprep.subr.bf16.mxu0 0
    %237 = vmatpush1.bf16.msra.mxu0 %v228
    %238 = vmatprep.subr.bf16.mxu0 0
    %239 = vmatpush1.bf16.msra.mxu0 %v229
    %240 = vmatprep.subr.bf16.mxu0 0
    %241 = vmatpush1.bf16.msra.mxu0 0
    %242 = vmatprep.subr.bf16.mxu0 0
    %243 = vmatpush1.bf16.msra.mxu0 0
    %244 = vmatprep.subr.bf16.mxu0 0
    %245 = vmatpush1.bf16.msra.mxu0 0
    %246 = vmatprep.subr.bf16.mxu0 0
    %247 = vmatpush1.bf16.msra.mxu0 0
    %248 = vmatprep.subr.bf16.mxu0 0
    %249 = vmatpush1.bf16.msra.mxu0 0
    %250 = vmatprep.subr.bf16.mxu0 0
    %251 = vmatpush1.bf16.msra.mxu0 0
    %252 = vmatprep.subr.bf16.mxu0 0
    %253 = vmatpush1.bf16.msra.mxu0 0
    %254 = vmatprep.subr.bf16.mxu0 0
    %255 = vmatpush1.bf16.msra.mxu0 0
    %256 = vmatprep.subr.bf16.mxu0 0
    %257 = vmatpush1.bf16.msra.mxu0 0
    %258 = vmatprep.subr.bf16.mxu0 0
    %259 = vmatpush1.bf16.msra.mxu0 0
    %260 = vmatprep.subr.bf16.mxu0 0
    %261 = vmatpush1.bf16.msra.mxu0 0
    %262 = vmatprep.subr.bf16.mxu0 0
    %263 = vmatpush1.bf16.msra.mxu0 0
    %264 = vmatprep.subr.bf16.mxu0 0
    %265 = vmatpush1.bf16.msra.mxu0 0
    %266 = vmatprep.subr.bf16.mxu0 0
    %267 = vmatpush1.bf16.msra.mxu0 0
    %268 = vmatprep.mubr.bf16.mxu0 0
    %269 = vmatmul.mubr.bf16.gmra.mrb[0].mxu0 %v234
    %v270 = vpop.f32.mrb[0].mxu0
    %v271 = vadd.f32 %v218, %v270
    %v272 = vpop.f32.mrb[0].mxu0
    %v273 = vpop.f32.mrb[0].mxu0
    %v274 = vpop.f32.mrb[0].mxu0
    %275 = vdwg.mxu0
    %v276 = vmax.f32 %v271, 0.0
    %v277 = vld [vmem:[%s7] sm:$0xf]
    %v278 = vld [vmem:[%s7 + $0x4] sm:$0xf]
    %v279 = vld [vmem:[%s7 + $0x8] sm:$0xf]
    %v280 = vld [vmem:[%s7 + $0xc] sm:$0xf]
    %v281 = vld [vmem:[%s8] sm:$0x1]
    %v282 = vpack.c.bf16 %v276, %v276
    %v284 = vlaneseq
    %v285 = vshrl.u32 %v284, 7
    %v286 = vsub.s32 0, %v285
    %v287 = vrot.slane %v281, %v286
    %v293 = vunpack.c.l.b16 %v277
    %v294 = vunpack.c.l.b16 %v278
    %v295 = vunpack.c.l.b16 %v279
    %v296 = vunpack.c.l.b16 %v280
    %v297 = vpack.c.b16 %v294, %v293
    %v298 = vpack.c.b16 %v296, %v295
    %v302 = vsel %vm232, %v282, 0
    %304 = vmatprep.subr.bf16.mxu0 0
    %305 = vmatpush1.bf16.msra.mxu0 %v297
    %306 = vmatprep.subr.bf16.mxu0 0
    %307 = vmatpush1.bf16.msra.mxu0 %v298
    %308 = vmatprep.subr.bf16.mxu0 0
    %309 = vmatpush1.bf16.msra.mxu0 0
    %310 = vmatprep.subr.bf16.mxu0 0
    %311 = vmatpush1.bf16.msra.mxu0 0
    %312 = vmatprep.subr.bf16.mxu0 0
    %313 = vmatpush1.bf16.msra.mxu0 0
    %314 = vmatprep.subr.bf16.mxu0 0
    %315 = vmatpush1.bf16.msra.mxu0 0
    %316 = vmatprep.subr.bf16.mxu0 0
    %317 = vmatpush1.bf16.msra.mxu0 0
    %318 = vmatprep.subr.bf16.mxu0 0
    %319 = vmatpush1.bf16.msra.mxu0 0
    %320 = vmatprep.subr.bf16.mxu0 0
    %321 = vmatpush1.bf16.msra.mxu0 0
    %322 = vmatprep.subr.bf16.mxu0 0
    %323 = vmatpush1.bf16.msra.mxu0 0
    %324 = vmatprep.subr.bf16.mxu0 0
    %325 = vmatpush1.bf16.msra.mxu0 0
    %326 = vmatprep.subr.bf16.mxu0 0
    %327 = vmatpush1.bf16.msra.mxu0 0
    %328 = vmatprep.subr.bf16.mxu0 0
    %329 = vmatpush1.bf16.msra.mxu0 0
    %330 = vmatprep.subr.bf16.mxu0 0
    %331 = vmatpush1.bf16.msra.mxu0 0
    %332 = vmatprep.subr.bf16.mxu0 0
    %333 = vmatpush1.bf16.msra.mxu0 0
    %334 = vmatprep.subr.bf16.mxu0 0
    %335 = vmatpush1.bf16.msra.mxu0 0
    %336 = vmatprep.mubr.bf16.mxu0 0
    %337 = vmatmul.mubr.bf16.gmra.mrb[0].mxu0 %v302
    %v338 = vpop.f32.mrb[0].mxu0
    %v339 = vadd.f32 %v287, %v338
    %v340 = vpop.f32.mrb[0].mxu0
    %v341 = vpop.f32.mrb[0].mxu0
    %v342 = vpop.f32.mrb[0].mxu0
    %343 = vdwg.mxu0
    %v344 = vlaneseq
    %v345 = vand.u32 %v344, 127
    %vm346 = vcmp.lt.s32.totalorder %v345, 16
    %v347 = vsel %vm346, 1, 0
    %v348 = vcvt.s32.f32 %v347
    %v349 = vmul.f32 %v339, %v348
    %350 = vadd.xlane.f32.xlu0 %v349
    %v351 = vpop.xlane.xlu0 %350
    %v352 = vmul.f32 %v351, 0.0625
    %v353 = vsub.f32 %v339, %v352
    %v354 = vmul.f32 %v353, %v348
    %v355 = vmul.f32 %v354, %v354
    %356 = vadd.xlane.f32.xlu0 %v355
    %v357 = vpop.xlane.xlu0 %356
    %v358 = vmul.f32 %v357, 0.0625
    %v359 = vadd.f32 %v358, 1e-05
    %v360 = vrsqrt.pop %v359
    %v361 = vmul.f32 %v354, %v360
    %v362 = vld [vmem:[%s9] sm:$0x1]
    %v364 = vlaneseq
    %v365 = vshrl.u32 %v364, 7
    %v366 = vsub.s32 0, %v365
    %v367 = vrot.slane %v362, %v366
    %v369 = vmul.f32 %v361, %v367
    %v370 = vld [vmem:[%s10] sm:$0x1]
    %v372 = vlaneseq
    %v373 = vshrl.u32 %v372, 7
    %v374 = vsub.s32 0, %v373
    %v375 = vrot.slane %v370, %v374
    %v377 = vadd.f32 %v369, %v375
    %378 = vst [vmem:[#allocation2] sm:$0xff] %v377
    // Predicated region
    $region46: #{node_model_forward.3} parent=1 // pred_check
      _
    $region47: #{node_model_forward.3} parent=1 // pred_check_branch
      %380 = sbr.rel (0) target = $region49
    $region48: #{node_model_forward.3} parent=1 // pred_region
      %s382 = ssub.s32 128, 128
      %383 = vsyncadd [#allocation3], %s382
      %s385 = sshll.u32 [#allocation2], 4
      %s386 = int_to_ptr.vmem [resolvable:$true] %s385
      %388 = dma.vmem_to_hbm [thread:$0]  %s386, 128, %s11, [#allocation3]
    $region49: #{node_model_forward.3} parent=1 // pred_fallthru
      _
    // Predicated region
    $region50: #{node_model_forward.3} parent=1 // pred_check
      _
    $region51: #{node_model_forward.3} parent=1 // pred_check_branch
      %390 = sbr.rel (0) target = $region53
    $region52: #{node_model_forward.3} parent=1 // pred_region
      %391 = dma.done [#allocation3], 128
    $region53: #{node_model_forward.3} parent=1 // pred_fallthru
      _
    %392 = vsyncpa [#allocation3], 1

</llo_original>
